<compile_context>
chip_gen: v7x
topology: tpu7x:2x2x1
jax: 0.10.0
libtpu: 0.0.40
codegen_flags: <defaults>
</compile_context>

<pallas_src>
import jax
import jax.numpy as jnp
from jax.experimental import pallas as pl
from jax.experimental.pallas import tpu as pltpu

D_CLASS = 10
N_CLASSES = 1
RAND = 1
IMG_SHAPE = (1, 1)
IN_DIM = RAND + D_CLASS + N_CLASSES          # 12
HIDDEN = (128, 256, 512, 1024)
OUT_DIM = 1                                  # prod(img_shape)
BN_EPS = 0.8
LRELU_SLOPE = 0.2

# Operand tuple passed to pallas_call:
#   (labels2d, noise, w1n, p1, w2, p2, w3, p3, w4, p4, w5r, b5)
_W3_IDX = 6
_W4_IDX = 8


def _lrelu(x):
    # max(x, 0.2*x): 2 VPU ops instead of cmp+select, identical for slope < 1.
    return jnp.maximum(x, LRELU_SLOPE * x)


def _generator_kernel(lab_ref, noise_ref,
                      w1n_ref, p1_ref,
                      w2_ref, p2_ref,
                      w3_hbm_ref, p3_ref,
                      w4_hbm_ref, p4_ref,
                      w5_ref, b5_ref,
                      out_ref,
                      w3_vmem, w4_vmem, dma_sems):
    """Whole MLP in one grid step; ~1.6 MB of operands resident in VMEM."""
    # Kick off the two big weight transfers immediately; they stream in behind
    # the earlier layers and are waited just before their respective dot.
    w3_copy = pltpu.make_async_copy(w3_hbm_ref, w3_vmem, dma_sems.at[0])
    w4_copy = pltpu.make_async_copy(w4_hbm_ref, w4_vmem, dma_sems.at[1])
    w3_copy.start()
    w4_copy.start()

    def block(h, w, p_ref):
        # Linear + training-mode BatchNorm (biased batch var, eps=0.8) + LeakyReLU.
        p = p_ref[...]                                   # (3, dout): [b; gamma; beta]
        x = jnp.dot(h.astype(jnp.bfloat16), w,
                    preferred_element_type=jnp.float32) + p[0:1, :]
        mu = jnp.mean(x, axis=0, keepdims=True)
        var = jnp.mean((x - mu) * (x - mu), axis=0, keepdims=True)
        scale = p[1:2, :] * jax.lax.rsqrt(var + BN_EPS)
        shift = p[2:3, :] - mu * scale
        return _lrelu(x * scale + shift)

    # Layer 1 (no BN): [labels | noise] @ W1 + b1 with the concat folded away:
    #   = labels_col * W1[0,:]  +  noise @ W1[1:,:]  +  b1
    p1 = p1_ref[...]                                     # (2, 128): [W1 label row; b1]
    h = _lrelu(lab_ref[...] * p1[0:1, :]
               + jnp.dot(noise_ref[...], w1n_ref[...],
                         preferred_element_type=jnp.float32)
               + p1[1:2, :])

    h = block(h, w2_ref[...], p2_ref)                    # 128 -> 256
    w3_copy.wait()                                       # W3 now in VMEM
    h = block(h, w3_vmem[...], p3_ref)                   # 256 -> 512
    w4_copy.wait()                                       # W4 now in VMEM
    h = block(h, w4_vmem[...], p4_ref)                   # 512 -> 1024

    # Final 1024 -> 1 projection as a lane reduction (skips a 1-wide MXU pass).
    y = jnp.sum(h * w5_ref[...], axis=-1, keepdims=True) + b5_ref[...]
    out_ref[...] = jnp.tanh(y)


def init_params(key):
    """Init matching PyTorch Linear default U(-1/sqrt(fan_in), +), in kernel layout.

    Returns [w1n, p1, w2, p2, w3, p3, w4, p4, w5_row, b5] where
      w1n = W1[1:, :]            (11, 128)  f32
      p1  = [W1[0:1,:]; b1]      (2, 128)   f32
      w2/w3/w4                   bf16       (halve HBM weight traffic)
      p{2,3,4} = [b; gamma; beta](3, dout)  f32
      w5_row  = W5.T             (1, 1024)  f32, b5 (1, 1) f32
    """
    dims = (IN_DIM,) + HIDDEN + (OUT_DIM,)
    raw = []
    for din, dout in zip(dims[:-1], dims[1:]):
        key, kw, kb = jax.random.split(key, 3)
        bound = 1.0 / (float(din) ** 0.5)
        w = jax.random.uniform(kw, (din, dout), jnp.float32, -bound, bound)
        b = jax.random.uniform(kb, (1, dout), jnp.float32, -bound, bound)
        raw.append((w, b))

    (w1, b1), (w2, b2), (w3, b3), (w4, b4), (w5, b5) = raw

    def pack_bn(b, dout):
        return jnp.concatenate([b,
                                jnp.ones((1, dout), jnp.float32),
                                jnp.zeros((1, dout), jnp.float32)], axis=0)

    return [
        w1[1:, :],                                        # (11, 128)
        jnp.concatenate([w1[0:1, :], b1], axis=0),        # (2, 128)
        w2.astype(jnp.bfloat16), pack_bn(b2, HIDDEN[1]),
        w3.astype(jnp.bfloat16), pack_bn(b3, HIDDEN[2]),
        w4.astype(jnp.bfloat16), pack_bn(b4, HIDDEN[3]),
        w5.T, b5,                                         # (1, 1024), (1, 1)
    ]


@jax.jit
def generator_forward(noise, labels, *params):
    # glue: torch.cat((labels.reshape(-1,1), noise), -1) is folded into the
    # kernel's split layer-1 matmul; only a free reshape happens here.
    labels2d = labels.reshape(-1, 1).astype(jnp.float32)
    noise = noise.astype(jnp.float32)
    batch = noise.shape[0]

    operands = (labels2d, noise) + tuple(params)

    def full_vmem_spec(a):
        nd = a.ndim
        return pl.BlockSpec(a.shape, lambda i, _nd=nd: (0,) * _nd)

    in_specs = [
        pl.BlockSpec(memory_space=pl.ANY) if idx in (_W3_IDX, _W4_IDX)
        else full_vmem_spec(a)
        for idx, a in enumerate(operands)
    ]
    out_spec = pl.BlockSpec((batch, OUT_DIM), lambda i: (0, 0))

    img_flat = pl.pallas_call(
        _generator_kernel,
        out_shape=jax.ShapeDtypeStruct((batch, OUT_DIM), jnp.float32),
        grid_spec=pltpu.PrefetchScalarGridSpec(
            num_scalar_prefetch=0,
            grid=(1,),
            in_specs=in_specs,
            out_specs=out_spec,
            scratch_shapes=[
                pltpu.VMEM((HIDDEN[1], HIDDEN[2]), jnp.bfloat16),  # W3 buffer
                pltpu.VMEM((HIDDEN[2], HIDDEN[3]), jnp.bfloat16),  # W4 buffer
                pltpu.SemaphoreType.DMA((2,)),
            ],
        ),
        compiler_params=pltpu.CompilerParams(
            dimension_semantics=("arbitrary",)),
    )(*operands)

    # glue: img.view(B, *img_shape)
    return img_flat.reshape(batch, *IMG_SHAPE)


def reference_forward(noise, labels, params):
    """Pure-JAX reference mirroring the kernel's numerics (same bf16 casts)."""
    (w1n, p1, w2, p2, w3, p3, w4, p4, w5r, b5) = params
    w1 = jnp.concatenate([p1[0:1, :], w1n], axis=0)       # (12, 128)
    b1 = p1[1:2, :]
    x = jnp.concatenate([labels.reshape(-1, 1).astype(jnp.float32),
                         noise.astype(jnp.float32)], axis=-1)

    def bn_lrelu(x, p):
        mu = jnp.mean(x, axis=0, keepdims=True)
        var = jnp.mean((x - mu) ** 2, axis=0, keepdims=True)
        scale = p[1:2, :] * jax.lax.rsqrt(var + BN_EPS)
        return _lrelu(x * scale + (p[2:3, :] - mu * scale))

    h = _lrelu(jnp.dot(x, w1, preferred_element_type=jnp.float32) + b1)
    h = bn_lrelu(jnp.dot(h.astype(jnp.bfloat16), w2,
                         preferred_element_type=jnp.float32) + p2[0:1, :], p2)
    h = bn_lrelu(jnp.dot(h.astype(jnp.bfloat16), w3,
                         preferred_element_type=jnp.float32) + p3[0:1, :], p3)
    h = bn_lrelu(jnp.dot(h.astype(jnp.bfloat16), w4,
                         preferred_element_type=jnp.float32) + p4[0:1, :], p4)
    y = jnp.tanh(jnp.sum(h * w5r, axis=-1, keepdims=True) + b5)
    return y.reshape(-1, *IMG_SHAPE)


if __name__ == "__main__":
    key = jax.random.PRNGKey(0)
    kp, kn, kl = jax.random.split(key, 3)

    params = init_params(kp)

    # Small test batch. Throughput scales nearly linearly with B up to ~256
    # rows per call (same weight DMA, fuller MXU) if the caller can batch more.
    B = 8
    noise = jax.random.normal(kn, (B, RAND + D_CLASS), jnp.float32)   # (8, 11)
    labels = jax.random.uniform(kl, (B,), jnp.float32)                # (8,)

    img = generator_forward(noise, labels, *params)
    img = jax.block_until_ready(img)

    ref = reference_forward(noise, labels, params)
    assert img.shape == (B, *IMG_SHAPE), img.shape
    max_err = float(jnp.max(jnp.abs(img - ref)))
    assert jnp.allclose(img, ref, atol=5e-3, rtol=5e-3), f"max err {max_err}"

    print("KERNEL_OK")
</pallas_src>

<mosaic_0001>
module attributes {stable_mosaic.version = 11 : i64} {
  func.func @_generator_kernel(%arg0: i32, %arg1: memref<8x1xf32, #tpu.memory_space<vmem>>, %arg2: memref<8x11xf32, #tpu.memory_space<vmem>>, %arg3: memref<11x128xf32, #tpu.memory_space<vmem>>, %arg4: memref<2x128xf32, #tpu.memory_space<vmem>>, %arg5: memref<128x256xbf16, #tpu.memory_space<vmem>>, %arg6: memref<3x256xf32, #tpu.memory_space<vmem>>, %arg7: memref<256x512xbf16, #tpu.memory_space<any>>, %arg8: memref<3x512xf32, #tpu.memory_space<vmem>>, %arg9: memref<512x1024xbf16, #tpu.memory_space<any>>, %arg10: memref<3x1024xf32, #tpu.memory_space<vmem>>, %arg11: memref<1x1024xf32, #tpu.memory_space<vmem>>, %arg12: memref<1x1xf32, #tpu.memory_space<vmem>>, %arg13: memref<8x1xf32, #tpu.memory_space<vmem>>, %arg14: memref<256x512xbf16, #tpu.memory_space<vmem>>, %arg15: memref<512x1024xbf16, #tpu.memory_space<vmem>>, %arg16: memref<2x!tpu.dma_semaphore, #tpu.memory_space<semaphore_mem>>) attributes {dimension_semantics = [#tpu.dimension_semantics<arbitrary>], iteration_bounds = array<i64: 1>, scalar_prefetch = 0 : i64, scratch_operands = 3 : i64, tpu.core_type = #tpu.core_type<tc>, window_params = [{pipeline_mode = #tpu.pipeline_mode<synchronous>, transform_indices = @transform_0, window_bounds = array<i64: 8, 1>}, {pipeline_mode = #tpu.pipeline_mode<synchronous>, transform_indices = @transform_1, window_bounds = array<i64: 8, 11>}, {pipeline_mode = #tpu.pipeline_mode<synchronous>, transform_indices = @transform_2, window_bounds = array<i64: 11, 128>}, {pipeline_mode = #tpu.pipeline_mode<synchronous>, transform_indices = @transform_3, window_bounds = array<i64: 2, 128>}, {pipeline_mode = #tpu.pipeline_mode<synchronous>, transform_indices = @transform_4, window_bounds = array<i64: 128, 256>}, {pipeline_mode = #tpu.pipeline_mode<synchronous>, transform_indices = @transform_5, window_bounds = array<i64: 3, 256>}, {}, {pipeline_mode = #tpu.pipeline_mode<synchronous>, transform_indices = @transform_7, window_bounds = array<i64: 3, 512>}, {}, {pipeline_mode = #tpu.pipeline_mode<synchronous>, transform_indices = @transform_9, window_bounds = array<i64: 3, 1024>}, {pipeline_mode = #tpu.pipeline_mode<synchronous>, transform_indices = @transform_10, window_bounds = array<i64: 1, 1024>}, {pipeline_mode = #tpu.pipeline_mode<synchronous>, transform_indices = @transform_11, window_bounds = array<i64: 1, 1>}, {pipeline_mode = #tpu.pipeline_mode<synchronous>, transform_indices = @transform_12, window_bounds = array<i64: 8, 1>}]} {
    %c0_i32 = arith.constant 0 : i32
    %0 = tpu.memref_slice %arg16[%c0_i32] : memref<2x!tpu.dma_semaphore, #tpu.memory_space<semaphore_mem>> -> memref<1x!tpu.dma_semaphore, #tpu.memory_space<semaphore_mem>>
    %1 = tpu.memref_squeeze %0 : memref<1x!tpu.dma_semaphore, #tpu.memory_space<semaphore_mem>> -> memref<!tpu.dma_semaphore, #tpu.memory_space<semaphore_mem>>
    tpu.enqueue_dma source(%arg7 : memref<256x512xbf16, #tpu.memory_space<any>>) target(%arg14 : memref<256x512xbf16, #tpu.memory_space<vmem>>) target_semaphore(%1 : memref<!tpu.dma_semaphore, #tpu.memory_space<semaphore_mem>>)
    %c1_i32 = arith.constant 1 : i32
    %2 = tpu.memref_slice %arg16[%c1_i32] : memref<2x!tpu.dma_semaphore, #tpu.memory_space<semaphore_mem>> -> memref<1x!tpu.dma_semaphore, #tpu.memory_space<semaphore_mem>>
    %3 = tpu.memref_squeeze %2 : memref<1x!tpu.dma_semaphore, #tpu.memory_space<semaphore_mem>> -> memref<!tpu.dma_semaphore, #tpu.memory_space<semaphore_mem>>
    tpu.enqueue_dma source(%arg9 : memref<512x1024xbf16, #tpu.memory_space<any>>) target(%arg15 : memref<512x1024xbf16, #tpu.memory_space<vmem>>) target_semaphore(%3 : memref<!tpu.dma_semaphore, #tpu.memory_space<semaphore_mem>>)
    %c0 = arith.constant 0 : index
    %c0_0 = arith.constant 0 : index
    %4 = vector.load %arg4[%c0, %c0_0] : memref<2x128xf32, #tpu.memory_space<vmem>>, vector<2x128xf32>
    %c0_1 = arith.constant 0 : index
    %c0_2 = arith.constant 0 : index
    %5 = vector.load %arg1[%c0_1, %c0_2] : memref<8x1xf32, #tpu.memory_space<vmem>>, vector<8x1xf32>
    %6 = vector.extract_strided_slice %4 {offsets = [0, 0], sizes = [1, 128], strides = [1, 1]} : vector<2x128xf32> to vector<1x128xf32>
    %7 = vector.broadcast %5 : vector<8x1xf32> to vector<8x128xf32>
    %8 = vector.broadcast %6 : vector<1x128xf32> to vector<8x128xf32>
    %9 = arith.mulf %7, %8 : vector<8x128xf32>
    %c0_3 = arith.constant 0 : index
    %c0_4 = arith.constant 0 : index
    %10 = vector.load %arg2[%c0_3, %c0_4] : memref<8x11xf32, #tpu.memory_space<vmem>>, vector<8x11xf32>
    %c0_5 = arith.constant 0 : index
    %c0_6 = arith.constant 0 : index
    %11 = vector.load %arg3[%c0_5, %c0_6] : memref<11x128xf32, #tpu.memory_space<vmem>>, vector<11x128xf32>
    %cst = arith.constant dense<0.000000e+00> : vector<8x128xf32>
    %12 = tpu.matmul %10, %11, %cst {dimension_numbers = #tpu.dot_dimension_numbers<[1], [0], [0], [1], [0, 0, 1, 1], [], []>} : vector<8x11xf32>, vector<11x128xf32>, vector<8x128xf32> -> vector<8x128xf32>
    %13 = arith.addf %9, %12 : vector<8x128xf32>
    %14 = vector.extract_strided_slice %4 {offsets = [1, 0], sizes = [1, 128], strides = [1, 1]} : vector<2x128xf32> to vector<1x128xf32>
    %15 = vector.broadcast %14 : vector<1x128xf32> to vector<8x128xf32>
    %16 = arith.addf %13, %15 : vector<8x128xf32>
    %cst_7 = arith.constant 2.000000e-01 : f32
    %17 = vector.broadcast %cst_7 : f32 to vector<8x128xf32>
    %18 = arith.mulf %17, %16 : vector<8x128xf32>
    %19 = arith.maximumf %16, %18 : vector<8x128xf32>
    %c0_8 = arith.constant 0 : index
    %c0_9 = arith.constant 0 : index
    %20 = vector.load %arg5[%c0_8, %c0_9] : memref<128x256xbf16, #tpu.memory_space<vmem>>, vector<128x256xbf16>
    %c0_10 = arith.constant 0 : index
    %c0_11 = arith.constant 0 : index
    %21 = vector.load %arg6[%c0_10, %c0_11] : memref<3x256xf32, #tpu.memory_space<vmem>>, vector<3x256xf32>
    %22 = arith.truncf %19 : vector<8x128xf32> to vector<8x128xbf16>
    %cst_12 = arith.constant dense<0.000000e+00> : vector<8x256xf32>
    %23 = tpu.matmul %22, %20, %cst_12 {dimension_numbers = #tpu.dot_dimension_numbers<[1], [0], [0], [1], [0, 0, 1, 1], [], []>} : vector<8x128xbf16>, vector<128x256xbf16>, vector<8x256xf32> -> vector<8x256xf32>
    %24 = vector.extract_strided_slice %21 {offsets = [0, 0], sizes = [1, 256], strides = [1, 1]} : vector<3x256xf32> to vector<1x256xf32>
    %25 = vector.broadcast %24 : vector<1x256xf32> to vector<8x256xf32>
    %26 = arith.addf %23, %25 : vector<8x256xf32>
    %cst_13 = arith.constant dense<0.000000e+00> : vector<256xf32>
    %27 = vector.multi_reduction <add>, %26, %cst_13 [0] : vector<8x256xf32> to vector<256xf32>
    %28 = vector.shape_cast %27 : vector<256xf32> to vector<1x256xf32>
    %cst_14 = arith.constant 8.000000e+00 : f32
    %29 = vector.broadcast %cst_14 : f32 to vector<1x256xf32>
    %30 = arith.divf %28, %29 : vector<1x256xf32>
    %31 = vector.broadcast %30 : vector<1x256xf32> to vector<8x256xf32>
    %32 = arith.subf %26, %31 : vector<8x256xf32>
    %33 = vector.broadcast %30 : vector<1x256xf32> to vector<8x256xf32>
    %34 = arith.subf %26, %33 : vector<8x256xf32>
    %35 = arith.mulf %32, %34 : vector<8x256xf32>
    %cst_15 = arith.constant dense<0.000000e+00> : vector<256xf32>
    %36 = vector.multi_reduction <add>, %35, %cst_15 [0] : vector<8x256xf32> to vector<256xf32>
    %37 = vector.shape_cast %36 : vector<256xf32> to vector<1x256xf32>
    %cst_16 = arith.constant 8.000000e+00 : f32
    %38 = vector.broadcast %cst_16 : f32 to vector<1x256xf32>
    %39 = arith.divf %37, %38 : vector<1x256xf32>
    %40 = vector.extract_strided_slice %21 {offsets = [1, 0], sizes = [1, 256], strides = [1, 1]} : vector<3x256xf32> to vector<1x256xf32>
    %cst_17 = arith.constant 8.000000e-01 : f32
    %41 = vector.broadcast %cst_17 : f32 to vector<1x256xf32>
    %42 = arith.addf %39, %41 : vector<1x256xf32>
    %43 = math.rsqrt %42 : vector<1x256xf32>
    %44 = arith.mulf %40, %43 : vector<1x256xf32>
    %45 = vector.extract_strided_slice %21 {offsets = [2, 0], sizes = [1, 256], strides = [1, 1]} : vector<3x256xf32> to vector<1x256xf32>
    %46 = arith.mulf %30, %44 : vector<1x256xf32>
    %47 = arith.subf %45, %46 : vector<1x256xf32>
    %48 = vector.broadcast %44 : vector<1x256xf32> to vector<8x256xf32>
    %49 = arith.mulf %26, %48 : vector<8x256xf32>
    %50 = vector.broadcast %47 : vector<1x256xf32> to vector<8x256xf32>
    %51 = arith.addf %49, %50 : vector<8x256xf32>
    %cst_18 = arith.constant 2.000000e-01 : f32
    %52 = vector.broadcast %cst_18 : f32 to vector<8x256xf32>
    %53 = arith.mulf %52, %51 : vector<8x256xf32>
    %54 = arith.maximumf %51, %53 : vector<8x256xf32>
    %c0_i32_19 = arith.constant 0 : i32
    %55 = tpu.memref_slice %arg16[%c0_i32_19] : memref<2x!tpu.dma_semaphore, #tpu.memory_space<semaphore_mem>> -> memref<1x!tpu.dma_semaphore, #tpu.memory_space<semaphore_mem>>
    %56 = tpu.memref_squeeze %55 : memref<1x!tpu.dma_semaphore, #tpu.memory_space<semaphore_mem>> -> memref<!tpu.dma_semaphore, #tpu.memory_space<semaphore_mem>>
    tpu.wait_dma2 semaphore(%56 : memref<!tpu.dma_semaphore, #tpu.memory_space<semaphore_mem>>) src(%arg7 : memref<256x512xbf16, #tpu.memory_space<any>>) dst(%arg14 : memref<256x512xbf16, #tpu.memory_space<vmem>>)
    %c0_20 = arith.constant 0 : index
    %c0_21 = arith.constant 0 : index
    %57 = vector.load %arg14[%c0_20, %c0_21] : memref<256x512xbf16, #tpu.memory_space<vmem>>, vector<256x512xbf16>
    %c0_22 = arith.constant 0 : index
    %c0_23 = arith.constant 0 : index
    %58 = vector.load %arg8[%c0_22, %c0_23] : memref<3x512xf32, #tpu.memory_space<vmem>>, vector<3x512xf32>
    %59 = arith.truncf %54 : vector<8x256xf32> to vector<8x256xbf16>
    %cst_24 = arith.constant dense<0.000000e+00> : vector<8x512xf32>
    %60 = tpu.matmul %59, %57, %cst_24 {dimension_numbers = #tpu.dot_dimension_numbers<[1], [0], [0], [1], [0, 0, 1, 1], [], []>} : vector<8x256xbf16>, vector<256x512xbf16>, vector<8x512xf32> -> vector<8x512xf32>
    %61 = vector.extract_strided_slice %58 {offsets = [0, 0], sizes = [1, 512], strides = [1, 1]} : vector<3x512xf32> to vector<1x512xf32>
    %62 = vector.broadcast %61 : vector<1x512xf32> to vector<8x512xf32>
    %63 = arith.addf %60, %62 : vector<8x512xf32>
    %cst_25 = arith.constant dense<0.000000e+00> : vector<512xf32>
    %64 = vector.multi_reduction <add>, %63, %cst_25 [0] : vector<8x512xf32> to vector<512xf32>
    %65 = vector.shape_cast %64 : vector<512xf32> to vector<1x512xf32>
    %cst_26 = arith.constant 8.000000e+00 : f32
    %66 = vector.broadcast %cst_26 : f32 to vector<1x512xf32>
    %67 = arith.divf %65, %66 : vector<1x512xf32>
    %68 = vector.broadcast %67 : vector<1x512xf32> to vector<8x512xf32>
    %69 = arith.subf %63, %68 : vector<8x512xf32>
    %70 = vector.broadcast %67 : vector<1x512xf32> to vector<8x512xf32>
    %71 = arith.subf %63, %70 : vector<8x512xf32>
    %72 = arith.mulf %69, %71 : vector<8x512xf32>
    %cst_27 = arith.constant dense<0.000000e+00> : vector<512xf32>
    %73 = vector.multi_reduction <add>, %72, %cst_27 [0] : vector<8x512xf32> to vector<512xf32>
    %74 = vector.shape_cast %73 : vector<512xf32> to vector<1x512xf32>
    %cst_28 = arith.constant 8.000000e+00 : f32
    %75 = vector.broadcast %cst_28 : f32 to vector<1x512xf32>
    %76 = arith.divf %74, %75 : vector<1x512xf32>
    %77 = vector.extract_strided_slice %58 {offsets = [1, 0], sizes = [1, 512], strides = [1, 1]} : vector<3x512xf32> to vector<1x512xf32>
    %cst_29 = arith.constant 8.000000e-01 : f32
    %78 = vector.broadcast %cst_29 : f32 to vector<1x512xf32>
    %79 = arith.addf %76, %78 : vector<1x512xf32>
    %80 = math.rsqrt %79 : vector<1x512xf32>
    %81 = arith.mulf %77, %80 : vector<1x512xf32>
    %82 = vector.extract_strided_slice %58 {offsets = [2, 0], sizes = [1, 512], strides = [1, 1]} : vector<3x512xf32> to vector<1x512xf32>
    %83 = arith.mulf %67, %81 : vector<1x512xf32>
    %84 = arith.subf %82, %83 : vector<1x512xf32>
    %85 = vector.broadcast %81 : vector<1x512xf32> to vector<8x512xf32>
    %86 = arith.mulf %63, %85 : vector<8x512xf32>
    %87 = vector.broadcast %84 : vector<1x512xf32> to vector<8x512xf32>
    %88 = arith.addf %86, %87 : vector<8x512xf32>
    %cst_30 = arith.constant 2.000000e-01 : f32
    %89 = vector.broadcast %cst_30 : f32 to vector<8x512xf32>
    %90 = arith.mulf %89, %88 : vector<8x512xf32>
    %91 = arith.maximumf %88, %90 : vector<8x512xf32>
    %c1_i32_31 = arith.constant 1 : i32
    %92 = tpu.memref_slice %arg16[%c1_i32_31] : memref<2x!tpu.dma_semaphore, #tpu.memory_space<semaphore_mem>> -> memref<1x!tpu.dma_semaphore, #tpu.memory_space<semaphore_mem>>
    %93 = tpu.memref_squeeze %92 : memref<1x!tpu.dma_semaphore, #tpu.memory_space<semaphore_mem>> -> memref<!tpu.dma_semaphore, #tpu.memory_space<semaphore_mem>>
    tpu.wait_dma2 semaphore(%93 : memref<!tpu.dma_semaphore, #tpu.memory_space<semaphore_mem>>) src(%arg9 : memref<512x1024xbf16, #tpu.memory_space<any>>) dst(%arg15 : memref<512x1024xbf16, #tpu.memory_space<vmem>>)
    %c0_32 = arith.constant 0 : index
    %c0_33 = arith.constant 0 : index
    %94 = vector.load %arg15[%c0_32, %c0_33] : memref<512x1024xbf16, #tpu.memory_space<vmem>>, vector<512x1024xbf16>
    %c0_34 = arith.constant 0 : index
    %c0_35 = arith.constant 0 : index
    %95 = vector.load %arg10[%c0_34, %c0_35] : memref<3x1024xf32, #tpu.memory_space<vmem>>, vector<3x1024xf32>
    %96 = arith.truncf %91 : vector<8x512xf32> to vector<8x512xbf16>
    %cst_36 = arith.constant dense<0.000000e+00> : vector<8x1024xf32>
    %97 = tpu.matmul %96, %94, %cst_36 {dimension_numbers = #tpu.dot_dimension_numbers<[1], [0], [0], [1], [0, 0, 1, 1], [], []>} : vector<8x512xbf16>, vector<512x1024xbf16>, vector<8x1024xf32> -> vector<8x1024xf32>
    %98 = vector.extract_strided_slice %95 {offsets = [0, 0], sizes = [1, 1024], strides = [1, 1]} : vector<3x1024xf32> to vector<1x1024xf32>
    %99 = vector.broadcast %98 : vector<1x1024xf32> to vector<8x1024xf32>
    %100 = arith.addf %97, %99 : vector<8x1024xf32>
    %cst_37 = arith.constant dense<0.000000e+00> : vector<1024xf32>
    %101 = vector.multi_reduction <add>, %100, %cst_37 [0] : vector<8x1024xf32> to vector<1024xf32>
    %102 = vector.shape_cast %101 : vector<1024xf32> to vector<1x1024xf32>
    %cst_38 = arith.constant 8.000000e+00 : f32
    %103 = vector.broadcast %cst_38 : f32 to vector<1x1024xf32>
    %104 = arith.divf %102, %103 : vector<1x1024xf32>
    %105 = vector.broadcast %104 : vector<1x1024xf32> to vector<8x1024xf32>
    %106 = arith.subf %100, %105 : vector<8x1024xf32>
    %107 = vector.broadcast %104 : vector<1x1024xf32> to vector<8x1024xf32>
    %108 = arith.subf %100, %107 : vector<8x1024xf32>
    %109 = arith.mulf %106, %108 : vector<8x1024xf32>
    %cst_39 = arith.constant dense<0.000000e+00> : vector<1024xf32>
    %110 = vector.multi_reduction <add>, %109, %cst_39 [0] : vector<8x1024xf32> to vector<1024xf32>
    %111 = vector.shape_cast %110 : vector<1024xf32> to vector<1x1024xf32>
    %cst_40 = arith.constant 8.000000e+00 : f32
    %112 = vector.broadcast %cst_40 : f32 to vector<1x1024xf32>
    %113 = arith.divf %111, %112 : vector<1x1024xf32>
    %114 = vector.extract_strided_slice %95 {offsets = [1, 0], sizes = [1, 1024], strides = [1, 1]} : vector<3x1024xf32> to vector<1x1024xf32>
    %cst_41 = arith.constant 8.000000e-01 : f32
    %115 = vector.broadcast %cst_41 : f32 to vector<1x1024xf32>
    %116 = arith.addf %113, %115 : vector<1x1024xf32>
    %117 = math.rsqrt %116 : vector<1x1024xf32>
    %118 = arith.mulf %114, %117 : vector<1x1024xf32>
    %119 = vector.extract_strided_slice %95 {offsets = [2, 0], sizes = [1, 1024], strides = [1, 1]} : vector<3x1024xf32> to vector<1x1024xf32>
    %120 = arith.mulf %104, %118 : vector<1x1024xf32>
    %121 = arith.subf %119, %120 : vector<1x1024xf32>
    %122 = vector.broadcast %118 : vector<1x1024xf32> to vector<8x1024xf32>
    %123 = arith.mulf %100, %122 : vector<8x1024xf32>
    %124 = vector.broadcast %121 : vector<1x1024xf32> to vector<8x1024xf32>
    %125 = arith.addf %123, %124 : vector<8x1024xf32>
    %cst_42 = arith.constant 2.000000e-01 : f32
    %126 = vector.broadcast %cst_42 : f32 to vector<8x1024xf32>
    %127 = arith.mulf %126, %125 : vector<8x1024xf32>
    %128 = arith.maximumf %125, %127 : vector<8x1024xf32>
    %c0_43 = arith.constant 0 : index
    %c0_44 = arith.constant 0 : index
    %129 = vector.load %arg11[%c0_43, %c0_44] : memref<1x1024xf32, #tpu.memory_space<vmem>>, vector<1x1024xf32>
    %130 = vector.broadcast %129 : vector<1x1024xf32> to vector<8x1024xf32>
    %131 = arith.mulf %128, %130 : vector<8x1024xf32>
    %cst_45 = arith.constant dense<0.000000e+00> : vector<8xf32>
    %132 = vector.multi_reduction <add>, %131, %cst_45 [1] : vector<8x1024xf32> to vector<8xf32>
    %133 = vector.shape_cast %132 : vector<8xf32> to vector<8x1xf32>
    %c0_46 = arith.constant 0 : index
    %c0_47 = arith.constant 0 : index
    %134 = vector.load %arg12[%c0_46, %c0_47] : memref<1x1xf32, #tpu.memory_space<vmem>>, vector<1x1xf32>
    %135 = vector.broadcast %134 : vector<1x1xf32> to vector<8x1xf32>
    %136 = arith.addf %133, %135 : vector<8x1xf32>
    %137 = math.tanh %136 : vector<8x1xf32>
    %c0_48 = arith.constant 0 : index
    %c0_49 = arith.constant 0 : index
    %138 = vector.load %arg13[%c0_48, %c0_49] : memref<8x1xf32, #tpu.memory_space<vmem>>, vector<8x1xf32>
    tpu.vector_store %arg13[%c0_48, %c0_49], %137 {strides = array<i32>} : memref<8x1xf32, #tpu.memory_space<vmem>>, vector<8x1xf32>,
    return
  }
  func.func @transform_0(%arg0: i32) -> (i32, i32) {
    %c0_i32 = arith.constant 0 : i32
    %c0_i32_0 = arith.constant 0 : i32
    %c0_i32_1 = arith.constant 0 : i32
    return %c0_i32, %c0_i32_0 : i32, i32
  }
  func.func @transform_1(%arg0: i32) -> (i32, i32) {
    %c0_i32 = arith.constant 0 : i32
    %c0_i32_0 = arith.constant 0 : i32
    %c0_i32_1 = arith.constant 0 : i32
    return %c0_i32, %c0_i32_0 : i32, i32
  }
  func.func @transform_2(%arg0: i32) -> (i32, i32) {
    %c0_i32 = arith.constant 0 : i32
    %c0_i32_0 = arith.constant 0 : i32
    %c0_i32_1 = arith.constant 0 : i32
    return %c0_i32, %c0_i32_0 : i32, i32
  }
  func.func @transform_3(%arg0: i32) -> (i32, i32) {
    %c0_i32 = arith.constant 0 : i32
    %c0_i32_0 = arith.constant 0 : i32
    %c0_i32_1 = arith.constant 0 : i32
    return %c0_i32, %c0_i32_0 : i32, i32
  }
  func.func @transform_4(%arg0: i32) -> (i32, i32) {
    %c0_i32 = arith.constant 0 : i32
    %c0_i32_0 = arith.constant 0 : i32
    %c0_i32_1 = arith.constant 0 : i32
    return %c0_i32, %c0_i32_0 : i32, i32
  }
  func.func @transform_5(%arg0: i32) -> (i32, i32) {
    %c0_i32 = arith.constant 0 : i32
    %c0_i32_0 = arith.constant 0 : i32
    %c0_i32_1 = arith.constant 0 : i32
    return %c0_i32, %c0_i32_0 : i32, i32
  }
  func.func @transform_7(%arg0: i32) -> (i32, i32) {
    %c0_i32 = arith.constant 0 : i32
    %c0_i32_0 = arith.constant 0 : i32
    %c0_i32_1 = arith.constant 0 : i32
    return %c0_i32, %c0_i32_0 : i32, i32
  }
  func.func @transform_9(%arg0: i32) -> (i32, i32) {
    %c0_i32 = arith.constant 0 : i32
    %c0_i32_0 = arith.constant 0 : i32
    %c0_i32_1 = arith.constant 0 : i32
    return %c0_i32, %c0_i32_0 : i32, i32
  }
  func.func @transform_10(%arg0: i32) -> (i32, i32) {
    %c0_i32 = arith.constant 0 : i32
    %c0_i32_0 = arith.constant 0 : i32
    %c0_i32_1 = arith.constant 0 : i32
    return %c0_i32, %c0_i32_0 : i32, i32
  }
  func.func @transform_11(%arg0: i32) -> (i32, i32) {
    %c0_i32 = arith.constant 0 : i32
    %c0_i32_0 = arith.constant 0 : i32
    %c0_i32_1 = arith.constant 0 : i32
    return %c0_i32, %c0_i32_0 : i32, i32
  }
  func.func @transform_12(%arg0: i32) -> (i32, i32) {
    %c0_i32 = arith.constant 0 : i32
    %c0_i32_0 = arith.constant 0 : i32
    %c0_i32_1 = arith.constant 0 : i32
    return %c0_i32, %c0_i32_0 : i32, i32
  }
}

</mosaic_0001>

<llo_original>
// kernel: generator_forward.1
$region0: #{generator_forward.1}
  #allocation0 [shape = 'u32[]', space=smem, size = 0x4, offset = 0x4, fixed_abs, tag = 'smem constant byte address 0x4 - core index']
  #allocation1 [shape = 'u32[144,128]{1,0:T(1,128)}', space=vmem, size = 0x12000, scoped, tag = 'internal scratch']
  #allocation2 [shape = 'bf16[256,512]{1,0:T(16,128)(2,1)}', space=vmem, size = 0x40000, scoped, tag = 'scratch operand']
  #allocation3 [shape = 'bf16[512,1024]{1,0:T(16,128)(2,1)}', space=vmem, size = 0x100000, scoped, tag = 'scratch operand']
  #allocation4 [shape = 's32[2]{0}', space=sflag, size = 0x8, scoped, tag = 'scratch operand']
  #allocation5 [shape = 'f32[1,1]{1,0:T(1,128)S(1)}', space=vmem, size = 0x200, scoped, tag = 'scoped memory for generator_forward.1']
  #allocation14 [shape = 's32[]', space=sflag, size = 0x4, offset = 0, fixed_abs, tag = 'sflag constant byte address 0x0 - dummy sync flag']
  #allocation16 [shape = 's32[]', space=sflag, size = 0x4, offset = 0, fixed_abs, tag = 'sflag constant byte address 0x0 - dummy sync flag']
  %s0 = inlined_call_operand.vmem [shape: f32[8,1], index: 0, kind: input, shape index: {}]
  %s1 = inlined_call_operand.hbm [shape: f32[8,11], index: 1, kind: input, shape index: {}]
  %s2 = inlined_call_operand.vmem [shape: f32[11,128], index: 2, kind: input, shape index: {}]
  %s3 = inlined_call_operand.vmem [shape: f32[2,128], index: 3, kind: input, shape index: {}]
  %s4 = inlined_call_operand.hbm [shape: bf16[128,256], index: 4, kind: input, shape index: {}]
  %s5 = inlined_call_operand.hbm [shape: f32[3,256], index: 5, kind: input, shape index: {}]
  %s6 = inlined_call_operand.hbm [shape: bf16[256,512], index: 6, kind: input, shape index: {}]
  %s7 = inlined_call_operand.hbm [shape: f32[3,512], index: 7, kind: input, shape index: {}]
  %s8 = inlined_call_operand.hbm [shape: bf16[512,1024], index: 8, kind: input, shape index: {}]
  %s9 = inlined_call_operand.vmem [shape: f32[3,1024], index: 9, kind: input, shape index: {}]
  %s10 = inlined_call_operand.hbm [shape: f32[1,1024], index: 10, kind: input, shape index: {}]
  %s11 = inlined_call_operand.<no memory space> [shape: f32[1,1], index: 11, kind: input, shape index: {}]
  %s12 = inlined_call_operand.vmem [shape: f32[8,1], index: 12, kind: output, shape index: {}]
  %s13 = sld [smem:[#allocation0]]
  $region70: #{generator_forward.1} parent=0
    _
  %s15 = ssub.s32 1, %s13
  %s16 = scalar_select 0, %s15, %s13
  %v17 = vstv %s11
  %18 = vst [vmem:[#allocation5] sm:$0x1] %v17
  $region1: #{generator_forward.1} parent=0
    #allocation6 [shape = 'u8[4096]{0}', space=vmem, size = 0x1000, scoped, tag = 'input window, operand 1, single buffered']
    #allocation7 [shape = 's32[1]{0}', space=sflag, size = 0x4, scoped, tag = 'scoped memory for generator_forward.1']
    #allocation8 [shape = 'u8[65536]{0}', space=vmem, size = 0x10000, scoped, tag = 'input window, operand 4, single buffered']
    #allocation9 [shape = 's32[1]{0}', space=sflag, size = 0x4, scoped, tag = 'scoped memory for generator_forward.1']
    #allocation10 [shape = 'u8[4096]{0}', space=vmem, size = 0x1000, scoped, tag = 'input window, operand 5, single buffered']
    #allocation11 [shape = 'u8[8192]{0}', space=vmem, size = 0x2000, scoped, tag = 'input window, operand 7, single buffered']
    #allocation12 [shape = 's32[1]{0}', space=sflag, size = 0x4, scoped, tag = 'scoped memory for generator_forward.1']
    #allocation13 [shape = 'u8[4096]{0}', space=vmem, size = 0x1000, scoped, tag = 'input window, operand 10, single buffered']
    #allocation15 [shape = 'u32[9]{0}', space=smem, size = 0x24, scoped, tag = 'DMA stride descriptor']
    #allocation17 [shape = 'u32[9]{0}', space=smem, size = 0x24, scoped, tag = 'DMA stride descriptor']
    %19 = vsyncpa [#allocation7], 0
    %20 = vsyncpa [#allocation9], 0
    %21 = vsyncpa [#allocation12], 0
    // Predicated region
    $region2: #{generator_forward.1} parent=1 // pred_check
      _
    $region3: #{generator_forward.1} parent=1 // pred_check_branch
      %23 = sbr.rel (0) target = $region5
    $region4: #{generator_forward.1} parent=1 // pred_region
      _
    $region5: #{generator_forward.1} parent=1 // pred_fallthru
      _
    // Predicated region
    $region6: #{generator_forward.1} parent=1 // pred_check
      _
    $region7: #{generator_forward.1} parent=1 // pred_check_branch
      %25 = sbr.rel (0) target = $region9
    $region8: #{generator_forward.1} parent=1 // pred_region
      %s27 = ssub.s32 128, 128
      %28 = vsyncadd [#allocation7], %s27
      %s30 = sshll.u32 [#allocation6], 4
      %s31 = int_to_ptr.vmem [resolvable:$true] %s30
      %33 = dma.hbm_to_vmem [thread:$0]  %s1, 128, %s31, [#allocation7]
    $region9: #{generator_forward.1} parent=1 // pred_fallthru
      _
    // Predicated region
    $region10: #{generator_forward.1} parent=1 // pred_check
      _
    $region11: #{generator_forward.1} parent=1 // pred_check_branch
      %35 = sbr.rel (0) target = $region13
    $region12: #{generator_forward.1} parent=1 // pred_region
      _
    $region13: #{generator_forward.1} parent=1 // pred_fallthru
      _
    // Predicated region
    $region14: #{generator_forward.1} parent=1 // pred_check
      _
    $region15: #{generator_forward.1} parent=1 // pred_check_branch
      %37 = sbr.rel (0) target = $region17
    $region16: #{generator_forward.1} parent=1 // pred_region
      _
    $region17: #{generator_forward.1} parent=1 // pred_fallthru
      _
    // Predicated region
    $region18: #{generator_forward.1} parent=1 // pred_check
      _
    $region19: #{generator_forward.1} parent=1 // pred_check_branch
      %39 = sbr.rel (0) target = $region21
    $region20: #{generator_forward.1} parent=1 // pred_region
      %s41 = ssub.s32 2048, 2048
      %42 = vsyncadd [#allocation9], %s41
      %s43 = sshll.u32 [#allocation8], 4
      %s44 = int_to_ptr.vmem [resolvable:$true] %s43
      %49 = dma.hbm_to_vmem [thread:$0]  %s4, 2048, %s44, [#allocation9], 128, 128, 8
    $region21: #{generator_forward.1} parent=1 // pred_fallthru
      _
    // Predicated region
    $region22: #{generator_forward.1} parent=1 // pred_check
      _
    $region23: #{generator_forward.1} parent=1 // pred_check_branch
      %51 = sbr.rel (0) target = $region25
    $region24: #{generator_forward.1} parent=1 // pred_region
      %s53 = ssub.s32 128, 128
      %54 = vsyncadd [#allocation9], %s53
      %s56 = sshll.u32 [#allocation10], 4
      %s57 = int_to_ptr.vmem [resolvable:$true] %s56
      %59 = dma.hbm_to_vmem [thread:$0]  %s5, 128, %s57, [#allocation9]
    $region25: #{generator_forward.1} parent=1 // pred_fallthru
      _
    // Predicated region
    $region26: #{generator_forward.1} parent=1 // pred_check
      _
    $region27: #{generator_forward.1} parent=1 // pred_check_branch
      %61 = sbr.rel (0) target = $region29
    $region28: #{generator_forward.1} parent=1 // pred_region
      %s63 = ssub.s32 256, 256
      %64 = vsyncadd [#allocation12], %s63
      %s66 = sshll.u32 [#allocation11], 4
      %s67 = int_to_ptr.vmem [resolvable:$true] %s66
      %69 = dma.hbm_to_vmem [thread:$0]  %s7, 256, %s67, [#allocation12]
    $region29: #{generator_forward.1} parent=1 // pred_fallthru
      _
    // Predicated region
    $region30: #{generator_forward.1} parent=1 // pred_check
      _
    $region31: #{generator_forward.1} parent=1 // pred_check_branch
      %71 = sbr.rel (0) target = $region33
    $region32: #{generator_forward.1} parent=1 // pred_region
      _
    $region33: #{generator_forward.1} parent=1 // pred_fallthru
      _
    // Predicated region
    $region34: #{generator_forward.1} parent=1 // pred_check
      _
    $region35: #{generator_forward.1} parent=1 // pred_check_branch
      %73 = sbr.rel (0) target = $region37
    $region36: #{generator_forward.1} parent=1 // pred_region
      %s75 = ssub.s32 128, 128
      %76 = vsyncadd [#allocation12], %s75
      %s78 = sshll.u32 [#allocation13], 4
      %s79 = int_to_ptr.vmem [resolvable:$true] %s78
      %81 = dma.hbm_to_vmem [thread:$0]  %s10, 128, %s79, [#allocation12]
    $region37: #{generator_forward.1} parent=1 // pred_fallthru
      _
    // Predicated region
    $region38: #{generator_forward.1} parent=1 // pred_check
      _
    $region39: #{generator_forward.1} parent=1 // pred_check_branch
      %83 = sbr.rel (0) target = $region41
    $region40: #{generator_forward.1} parent=1 // pred_region
      _
    $region41: #{generator_forward.1} parent=1 // pred_fallthru
      _
    // Predicated region
    $region42: #{generator_forward.1} parent=1 // pred_check
      _
    $region43: #{generator_forward.1} parent=1 // pred_check_branch
      %85 = sbr.rel (0) target = $region45
    $region44: #{generator_forward.1} parent=1 // pred_region
      %86 = dma.done [#allocation7], 128
    $region45: #{generator_forward.1} parent=1 // pred_fallthru
      _
    // Predicated region
    $region46: #{generator_forward.1} parent=1 // pred_check
      _
    $region47: #{generator_forward.1} parent=1 // pred_check_branch
      %88 = sbr.rel (0) target = $region49
    $region48: #{generator_forward.1} parent=1 // pred_region
      %89 = dma.done [#allocation9], 2048
    $region49: #{generator_forward.1} parent=1 // pred_fallthru
      _
    // Predicated region
    $region50: #{generator_forward.1} parent=1 // pred_check
      _
    $region51: #{generator_forward.1} parent=1 // pred_check_branch
      %91 = sbr.rel (0) target = $region53
    $region52: #{generator_forward.1} parent=1 // pred_region
      %92 = dma.done [#allocation9], 128
    $region53: #{generator_forward.1} parent=1 // pred_fallthru
      _
    // Predicated region
    $region54: #{generator_forward.1} parent=1 // pred_check
      _
    $region55: #{generator_forward.1} parent=1 // pred_check_branch
      %94 = sbr.rel (0) target = $region57
    $region56: #{generator_forward.1} parent=1 // pred_region
      %95 = dma.done [#allocation12], 256
    $region57: #{generator_forward.1} parent=1 // pred_fallthru
      _
    // Predicated region
    $region58: #{generator_forward.1} parent=1 // pred_check
      _
    $region59: #{generator_forward.1} parent=1 // pred_check_branch
      %97 = sbr.rel (0) target = $region61
    $region60: #{generator_forward.1} parent=1 // pred_region
      %98 = dma.done [#allocation12], 128
    $region61: #{generator_forward.1} parent=1 // pred_fallthru
      _
    %s101 = sshll.u32 1, 14
    %s102 = sxor.u32 4294967295, %s101
    %s104 = sld [smem:[#allocation0]]
    %s105 = sadd.s32 2, %s104
    %s107 = sshll.u32 7, 26
    %s108 = sxor.u32 4294967295, %s107
    %s109 = sand.u32 0, %s108
    %s110 = sshll.u32 %s105, 26
    %s111 = sor.u32 %s109, %s110
    %s112 = sshll.u32 [#allocation2], 4
    %s113 = int_to_ptr.vmem [resolvable:$true] %s112
    %116 = sst [smem:[#allocation15]] 512
    %s117 = scalar_lea.smem [#allocation15], 1
    %118 = sst [smem:[%s117]] 512
    %s119 = scalar_lea.smem [#allocation15], 2
    %120 = sst [smem:[%s119]] 4
    %s121 = scalar_lea.smem [#allocation15], 3
    %122 = sst [smem:[%s121]] 64
    %s123 = scalar_lea.smem [#allocation15], 4
    %124 = sst [smem:[%s123]] 128
    %s125 = scalar_lea.smem [#allocation15], 5
    %126 = sst [smem:[%s125]] 2
    %s127 = scalar_lea.smem [#allocation15], 6
    %128 = sst [smem:[%s127]] 256
    %s129 = scalar_lea.smem [#allocation15], 7
    %130 = sst [smem:[%s129]] 64
    %s131 = scalar_lea.smem [#allocation15], 8
    %132 = sst [smem:[%s131]] 4
    %134 = dma.general %s6, 8192, %s113, [#allocation4], [#allocation14], [#allocation15], %s111, 0
    %s135 = scalar_lea.sflag [#allocation4], 1
    %s137 = sshll.u32 1, 14
    %s138 = sxor.u32 4294967295, %s137
    %s140 = sadd.s32 2, %s104
    %s142 = sshll.u32 7, 26
    %s143 = sxor.u32 4294967295, %s142
    %s144 = sand.u32 0, %s143
    %s145 = sshll.u32 %s140, 26
    %s146 = sor.u32 %s144, %s145
    %s147 = sshll.u32 [#allocation3], 4
    %s148 = int_to_ptr.vmem [resolvable:$true] %s147
    %151 = sst [smem:[#allocation17]] 1024
    %s152 = scalar_lea.smem [#allocation17], 1
    %153 = sst [smem:[%s152]] 1024
    %s154 = scalar_lea.smem [#allocation17], 2
    %155 = sst [smem:[%s154]] 8
    %s156 = scalar_lea.smem [#allocation17], 3
    %157 = sst [smem:[%s156]] 64
    %s158 = scalar_lea.smem [#allocation17], 4
    %159 = sst [smem:[%s158]] 128
    %s160 = scalar_lea.smem [#allocation17], 5
    %161 = sst [smem:[%s160]] 2
    %s162 = scalar_lea.smem [#allocation17], 6
    %163 = sst [smem:[%s162]] 512
    %s164 = scalar_lea.smem [#allocation17], 7
    %165 = sst [smem:[%s164]] 64
    %s166 = scalar_lea.smem [#allocation17], 8
    %167 = sst [smem:[%s166]] 4
    %169 = dma.general %s8, 32768, %s148, %s135, [#allocation16], [#allocation17], %s146, 0
    %v170 = vld [vmem:[%s3] sm:$0x3]
    %v171 = vld [vmem:[%s0] sm:$0xff]
    %173 = vset.pattern.permute.xlu0 0
    %174 = vperm.xlu0 %173, %v171
    %v175 = vpop.permute.xlu0 %174
    %v177 = vlaneseq
    %v178 = vshrl.u32 %v177, 7
    %v179 = vsub.s32 0, %v178
    %v180 = vrot.slane %v170, %v179
    %v181 = vmul.f32 %v175, %v180
    %v182 = vld [vmem:[#allocation6] sm:$0xff]
    %v183 = vld [vmem:[%s2] sm:$0xff]
    %v184 = vld [vmem:[%s2 + $0x8] sm:$0x7]
    %vm185 = vcmask 89088
    %v187 = vsel %vm185, %v182, 0
    %vm189 = vcmask 1042432
    %v191 = vsel %vm189, %v184, 0
    %193 = vmatprep.subr.mxu0 0.0
    %194 = vmatpush1.msra.mxu0 %v183
    %195 = vmatprep.subr.mxu0 0.0
    %196 = vmatpush1.msra.mxu0 %v191
    %197 = vmatprep.subr.mxu0 0.0
    %198 = vmatpush1.msra.mxu0 0.0
    %199 = vmatprep.subr.mxu0 0.0
    %200 = vmatpush1.msra.mxu0 0.0
    %201 = vmatprep.subr.mxu0 0.0
    %202 = vmatpush1.msra.mxu0 0.0
    %203 = vmatprep.subr.mxu0 0.0
    %204 = vmatpush1.msra.mxu0 0.0
    %205 = vmatprep.subr.mxu0 0.0
    %206 = vmatpush1.msra.mxu0 0.0
    %207 = vmatprep.subr.mxu0 0.0
    %208 = vmatpush1.msra.mxu0 0.0
    %209 = vmatprep.subr.mxu0 0.0
    %210 = vmatpush1.msra.mxu0 0.0
    %211 = vmatprep.subr.mxu0 0.0
    %212 = vmatpush1.msra.mxu0 0.0
    %213 = vmatprep.subr.mxu0 0.0
    %214 = vmatpush1.msra.mxu0 0.0
    %215 = vmatprep.subr.mxu0 0.0
    %216 = vmatpush1.msra.mxu0 0.0
    %217 = vmatprep.subr.mxu0 0.0
    %218 = vmatpush1.msra.mxu0 0.0
    %219 = vmatprep.subr.mxu0 0.0
    %220 = vmatpush1.msra.mxu0 0.0
    %221 = vmatprep.subr.mxu0 0.0
    %222 = vmatpush1.msra.mxu0 0.0
    %223 = vmatprep.subr.mxu0 0.0
    %224 = vmatpush1.msra.mxu0 0.0
    %225 = vmatprep.subr.mxu0 0.0
    %226 = vmatpush1.msra.mxu0 0.0
    %227 = vmatprep.subr.mxu0 0.0
    %228 = vmatpush1.msra.mxu0 0.0
    %229 = vmatprep.subr.mxu0 0.0
    %230 = vmatpush1.msra.mxu0 0.0
    %231 = vmatprep.subr.mxu0 0.0
    %232 = vmatpush1.msra.mxu0 0.0
    %233 = vmatprep.subr.mxu0 0.0
    %234 = vmatpush1.msra.mxu0 0.0
    %235 = vmatprep.subr.mxu0 0.0
    %236 = vmatpush1.msra.mxu0 0.0
    %237 = vmatprep.subr.mxu0 0.0
    %238 = vmatpush1.msra.mxu0 0.0
    %239 = vmatprep.subr.mxu0 0.0
    %240 = vmatpush1.msra.mxu0 0.0
    %241 = vmatprep.subr.mxu0 0.0
    %242 = vmatpush1.msra.mxu0 0.0
    %243 = vmatprep.subr.mxu0 0.0
    %244 = vmatpush1.msra.mxu0 0.0
    %245 = vmatprep.subr.mxu0 0.0
    %246 = vmatpush1.msra.mxu0 0.0
    %247 = vmatprep.subr.mxu0 0.0
    %248 = vmatpush1.msra.mxu0 0.0
    %249 = vmatprep.subr.mxu0 0.0
    %250 = vmatpush1.msra.mxu0 0.0
    %251 = vmatprep.subr.mxu0 0.0
    %252 = vmatpush1.msra.mxu0 0.0
    %253 = vmatprep.subr.mxu0 0.0
    %254 = vmatpush1.msra.mxu0 0.0
    %255 = vmatprep.subr.mxu0 0.0
    %256 = vmatpush1.msra.mxu0 0.0
    %257 = vmatprep.mubr.f32.mxu0 0.0
    %258 = vmatmul.mubr.f32.gmra.mrb[0].mxu0 %v187
    %v259 = vpop.f32.mrb[0].mxu0
    %v260 = vadd.f32 0.0, %v259
    %v261 = vpop.f32.mrb[0].mxu0
    %262 = vdwg.mxu0
    %v263 = vadd.f32 %v181, %v260
    %v264 = vlaneseq
    %v265 = vshrl.u32 %v264, 7
    %v266 = vsub.s32 1, %v265
    %v267 = vrot.slane %v170, %v266
    %v268 = vadd.f32 %v263, %v267
    %v269 = vmul.f32 %v268, 0.2
    %v270 = vmax.f32 %v268, %v269
    %v271 = vld [vmem:[#allocation8] sm:$0xff]
    %v272 = vld [vmem:[#allocation8 + $0x8] sm:$0xff]
    %v273 = vld [vmem:[#allocation8 + $0x10] sm:$0xff]
    %v274 = vld [vmem:[#allocation8 + $0x18] sm:$0xff]
    %v275 = vld [vmem:[#allocation8 + $0x20] sm:$0xff]
    %v276 = vld [vmem:[#allocation8 + $0x28] sm:$0xff]
    %v277 = vld [vmem:[#allocation8 + $0x30] sm:$0xff]
    %v278 = vld [vmem:[#allocation8 + $0x38] sm:$0xff]
    %v279 = vld [vmem:[#allocation8 + $0x40] sm:$0xff]
    %v280 = vld [vmem:[#allocation8 + $0x48] sm:$0xff]
    %v281 = vld [vmem:[#allocation8 + $0x50] sm:$0xff]
    %v282 = vld [vmem:[#allocation8 + $0x58] sm:$0xff]
    %v283 = vld [vmem:[#allocation8 + $0x60] sm:$0xff]
    %v284 = vld [vmem:[#allocation8 + $0x68] sm:$0xff]
    %v285 = vld [vmem:[#allocation8 + $0x70] sm:$0xff]
    %v286 = vld [vmem:[#allocation8 + $0x78] sm:$0xff]
    %v287 = vld [vmem:[#allocation10] sm:$0x77]
    %v288 = vpack.c.bf16 %v270, %v270
    %v290 = vlaneseq
    %v291 = vshrl.u32 %v290, 7
    %v292 = vsub.s32 0, %v291
    %v293 = vrot.slane %v287, %v292
    %v294 = vlaneseq
    %v295 = vshrl.u32 %v294, 7
    %v296 = vsub.s32 4, %v295
    %v297 = vrot.slane %v287, %v296
    %v300 = vlaneseq
    %v301 = vshrl.u32 %v300, 7
    %v302 = vsub.s32 0, %v301
    %v303 = vrot.slane %v293, %v302
    %v304 = vlaneseq
    %v305 = vshrl.u32 %v304, 7
    %v306 = vsub.s32 0, %v305
    %v307 = vrot.slane %v297, %v306
    %v324 = vunpack.c.l.b16 %v271
    %v325 = vunpack.c.h.b16 %v271
    %v326 = vunpack.c.l.b16 %v272
    %v327 = vunpack.c.h.b16 %v272
    %v328 = vunpack.c.l.b16 %v273
    %v329 = vunpack.c.h.b16 %v273
    %v330 = vunpack.c.l.b16 %v274
    %v331 = vunpack.c.h.b16 %v274
    %v332 = vunpack.c.l.b16 %v275
    %v333 = vunpack.c.h.b16 %v275
    %v334 = vunpack.c.l.b16 %v276
    %v335 = vunpack.c.h.b16 %v276
    %v336 = vunpack.c.l.b16 %v277
    %v337 = vunpack.c.h.b16 %v277
    %v338 = vunpack.c.l.b16 %v278
    %v339 = vunpack.c.h.b16 %v278
    %v340 = vunpack.c.l.b16 %v279
    %v341 = vunpack.c.h.b16 %v279
    %v342 = vunpack.c.l.b16 %v280
    %v343 = vunpack.c.h.b16 %v280
    %v344 = vunpack.c.l.b16 %v281
    %v345 = vunpack.c.h.b16 %v281
    %v346 = vunpack.c.l.b16 %v282
    %v347 = vunpack.c.h.b16 %v282
    %v348 = vunpack.c.l.b16 %v283
    %v349 = vunpack.c.h.b16 %v283
    %v350 = vunpack.c.l.b16 %v284
    %v351 = vunpack.c.h.b16 %v284
    %v352 = vunpack.c.l.b16 %v285
    %v353 = vunpack.c.h.b16 %v285
    %v354 = vunpack.c.l.b16 %v286
    %v355 = vunpack.c.h.b16 %v286
    %v356 = vpack.c.b16 %v326, %v324
    %v357 = vpack.c.b16 %v327, %v325
    %v358 = vpack.c.b16 %v330, %v328
    %v359 = vpack.c.b16 %v331, %v329
    %v360 = vpack.c.b16 %v334, %v332
    %v361 = vpack.c.b16 %v335, %v333
    %v362 = vpack.c.b16 %v338, %v336
    %v363 = vpack.c.b16 %v339, %v337
    %v364 = vpack.c.b16 %v342, %v340
    %v365 = vpack.c.b16 %v343, %v341
    %v366 = vpack.c.b16 %v346, %v344
    %v367 = vpack.c.b16 %v347, %v345
    %v368 = vpack.c.b16 %v350, %v348
    %v369 = vpack.c.b16 %v351, %v349
    %v370 = vpack.c.b16 %v354, %v352
    %v371 = vpack.c.b16 %v355, %v353
    %388 = vmatprep.subr.bf16.mxu0 %v357
    %389 = vmatpush1.bf16.msra.mxu0 %v356
    %390 = vmatprep.subr.bf16.mxu0 %v359
    %391 = vmatpush1.bf16.msra.mxu0 %v358
    %392 = vmatprep.subr.bf16.mxu0 %v361
    %393 = vmatpush1.bf16.msra.mxu0 %v360
    %394 = vmatprep.subr.bf16.mxu0 %v363
    %395 = vmatpush1.bf16.msra.mxu0 %v362
    %396 = vmatprep.subr.bf16.mxu0 %v365
    %397 = vmatpush1.bf16.msra.mxu0 %v364
    %398 = vmatprep.subr.bf16.mxu0 %v367
    %399 = vmatpush1.bf16.msra.mxu0 %v366
    %400 = vmatprep.subr.bf16.mxu0 %v369
    %401 = vmatpush1.bf16.msra.mxu0 %v368
    %402 = vmatprep.subr.bf16.mxu0 %v371
    %403 = vmatpush1.bf16.msra.mxu0 %v370
    %404 = vmatprep.subr.bf16.mxu0 0
    %405 = vmatpush1.bf16.msra.mxu0 0
    %406 = vmatprep.subr.bf16.mxu0 0
    %407 = vmatpush1.bf16.msra.mxu0 0
    %408 = vmatprep.subr.bf16.mxu0 0
    %409 = vmatpush1.bf16.msra.mxu0 0
    %410 = vmatprep.subr.bf16.mxu0 0
    %411 = vmatpush1.bf16.msra.mxu0 0
    %412 = vmatprep.subr.bf16.mxu0 0
    %413 = vmatpush1.bf16.msra.mxu0 0
    %414 = vmatprep.subr.bf16.mxu0 0
    %415 = vmatpush1.bf16.msra.mxu0 0
    %416 = vmatprep.subr.bf16.mxu0 0
    %417 = vmatpush1.bf16.msra.mxu0 0
    %418 = vmatprep.subr.bf16.mxu0 0
    %419 = vmatpush1.bf16.msra.mxu0 0
    %420 = vmatprep.mubr.bf16.mxu0 0
    %421 = vmatmul.mubr.bf16.gmra.mrb[0].mxu0 %v288
    %v422 = vpop.f32.mrb[0].mxu0
    %v423 = vadd.f32 %v303, %v422
    %v424 = vpop.f32.mrb[0].mxu0
    %v425 = vadd.f32 %v307, %v424
    %v426 = vpop.f32.mrb[0].mxu0
    %v427 = vpop.f32.mrb[0].mxu0
    %428 = vdwg.mxu0
    %v429 = vrot.slane %v423, 4
    %v430 = vadd.f32 %v423, %v429
    %v431 = vrot.slane %v430, 2
    %v432 = vadd.f32 %v430, %v431
    %v433 = vrot.slane %v432, 1
    %v434 = vadd.f32 %v432, %v433
    %v435 = vrot.slane %v425, 4
    %v436 = vadd.f32 %v425, %v435
    %v437 = vrot.slane %v436, 2
    %v438 = vadd.f32 %v436, %v437
    %v439 = vrot.slane %v438, 1
    %v440 = vadd.f32 %v438, %v439
    %v441 = vrcp.pop 8.0
    %v442 = vmul.f32 %v434, %v441
    %v443 = vmul.f32 %v440, %v441
    %v444 = vsub.f32 %v423, %v442
    %v445 = vsub.f32 %v425, %v443
    %v446 = vmul.f32 %v444, %v444
    %v447 = vmul.f32 %v445, %v445
    %v448 = vrot.slane %v446, 4
    %v449 = vadd.f32 %v446, %v448
    %v450 = vrot.slane %v449, 2
    %v451 = vadd.f32 %v449, %v450
    %v452 = vrot.slane %v451, 1
    %v453 = vadd.f32 %v451, %v452
    %v454 = vrot.slane %v447, 4
    %v455 = vadd.f32 %v447, %v454
    %v456 = vrot.slane %v455, 2
    %v457 = vadd.f32 %v455, %v456
    %v458 = vrot.slane %v457, 1
    %v459 = vadd.f32 %v457, %v458
    %v460 = vmul.f32 %v453, %v441
    %v461 = vmul.f32 %v459, %v441
    %v462 = vadd.f32 %v460, 0.8
    %v463 = vadd.f32 %v461, 0.8
    %v464 = vrsqrt.pop %v462
    %v465 = vrsqrt.pop %v463
    %v468 = vcombine.low %v464, %v465
    %v469 = vrot.slane %v468, 7
    %v471 = vmul.f32 %v287, %v469
    %v473 = vlaneseq
    %v474 = vshrl.u32 %v473, 7
    %v475 = vsub.s32 1, %v474
    %v476 = vrot.slane %v471, %v475
    %v477 = vlaneseq
    %v478 = vshrl.u32 %v477, 7
    %v479 = vsub.s32 5, %v478
    %v480 = vrot.slane %v471, %v479
    %v483 = vmul.f32 %v442, %v476
    %v484 = vmul.f32 %v443, %v480
    %v487 = vcombine.low %v483, %v484
    %v488 = vrot.slane %v487, 6
    %v490 = vsub.f32 %v287, %v488
    %v491 = vlaneseq
    %v492 = vshrl.u32 %v491, 7
    %v493 = vsub.s32 1, %v492
    %v494 = vrot.slane %v476, %v493
    %v495 = vlaneseq
    %v496 = vshrl.u32 %v495, 7
    %v497 = vsub.s32 1, %v496
    %v498 = vrot.slane %v480, %v497
    %v499 = vmul.f32 %v423, %v494
    %v500 = vmul.f32 %v425, %v498
    %v502 = vlaneseq
    %v503 = vshrl.u32 %v502, 7
    %v504 = vsub.s32 2, %v503
    %v505 = vrot.slane %v490, %v504
    %v506 = vlaneseq
    %v507 = vshrl.u32 %v506, 7
    %v508 = vsub.s32 6, %v507
    %v509 = vrot.slane %v490, %v508
    %v512 = vlaneseq
    %v513 = vshrl.u32 %v512, 7
    %v514 = vsub.s32 2, %v513
    %v515 = vrot.slane %v505, %v514
    %v516 = vlaneseq
    %v517 = vshrl.u32 %v516, 7
    %v518 = vsub.s32 2, %v517
    %v519 = vrot.slane %v509, %v518
    %v520 = vadd.f32 %v499, %v515
    %v521 = vadd.f32 %v500, %v519
    %v522 = vmul.f32 %v520, 0.2
    %v523 = vmul.f32 %v521, 0.2
    %v524 = vmax.f32 %v520, %v522
    %v525 = vmax.f32 %v521, %v523
    %s526 = smul.u32 4, 32
    %s527 = smul.u32 %s526, 4
    %s528 = sshll.u32 %s527, 4
    %529 = dma.done [#allocation4], %s528
    %v530 = vld [vmem:[#allocation2] sm:$0xff]
    %v531 = vld [vmem:[#allocation2 + $0x8] sm:$0xff]
    %v532 = vld [vmem:[#allocation2 + $0x10] sm:$0xff]
    %v533 = vld [vmem:[#allocation2 + $0x18] sm:$0xff]
    %v534 = vld [vmem:[#allocation2 + $0x20] sm:$0xff]
    %v535 = vld [vmem:[#allocation2 + $0x28] sm:$0xff]
    %v536 = vld [vmem:[#allocation2 + $0x30] sm:$0xff]
    %v537 = vld [vmem:[#allocation2 + $0x38] sm:$0xff]
    %v538 = vld [vmem:[#allocation2 + $0x40] sm:$0xff]
    %v539 = vld [vmem:[#allocation2 + $0x48] sm:$0xff]
    %v540 = vld [vmem:[#allocation2 + $0x50] sm:$0xff]
    %v541 = vld [vmem:[#allocation2 + $0x58] sm:$0xff]
    %v542 = vld [vmem:[#allocation2 + $0x60] sm:$0xff]
    %v543 = vld [vmem:[#allocation2 + $0x68] sm:$0xff]
    %v544 = vld [vmem:[#allocation2 + $0x70] sm:$0xff]
    %v545 = vld [vmem:[#allocation2 + $0x78] sm:$0xff]
    %v546 = vld [vmem:[#allocation2 + $0x80] sm:$0xff]
    %v547 = vld [vmem:[#allocation2 + $0x88] sm:$0xff]
    %v548 = vld [vmem:[#allocation2 + $0x90] sm:$0xff]
    %v549 = vld [vmem:[#allocation2 + $0x98] sm:$0xff]
    %v550 = vld [vmem:[#allocation2 + $0xa0] sm:$0xff]
    %v551 = vld [vmem:[#allocation2 + $0xa8] sm:$0xff]
    %v552 = vld [vmem:[#allocation2 + $0xb0] sm:$0xff]
    %v553 = vld [vmem:[#allocation2 + $0xb8] sm:$0xff]
    %v554 = vld [vmem:[#allocation2 + $0xc0] sm:$0xff]
    %v555 = vld [vmem:[#allocation2 + $0xc8] sm:$0xff]
    %v556 = vld [vmem:[#allocation2 + $0xd0] sm:$0xff]
    %v557 = vld [vmem:[#allocation2 + $0xd8] sm:$0xff]
    %v558 = vld [vmem:[#allocation2 + $0xe0] sm:$0xff]
    %v559 = vld [vmem:[#allocation2 + $0xe8] sm:$0xff]
    %v560 = vld [vmem:[#allocation2 + $0xf0] sm:$0xff]
    %v561 = vld [vmem:[#allocation2 + $0xf8] sm:$0xff]
    %v562 = vld [vmem:[#allocation2 + $0x100] sm:$0xff]
    %v563 = vld [vmem:[#allocation2 + $0x108] sm:$0xff]
    %v564 = vld [vmem:[#allocation2 + $0x110] sm:$0xff]
    %v565 = vld [vmem:[#allocation2 + $0x118] sm:$0xff]
    %v566 = vld [vmem:[#allocation2 + $0x120] sm:$0xff]
    %v567 = vld [vmem:[#allocation2 + $0x128] sm:$0xff]
    %v568 = vld [vmem:[#allocation2 + $0x130] sm:$0xff]
    %v569 = vld [vmem:[#allocation2 + $0x138] sm:$0xff]
    %v570 = vld [vmem:[#allocation2 + $0x140] sm:$0xff]
    %v571 = vld [vmem:[#allocation2 + $0x148] sm:$0xff]
    %v572 = vld [vmem:[#allocation2 + $0x150] sm:$0xff]
    %v573 = vld [vmem:[#allocation2 + $0x158] sm:$0xff]
    %v574 = vld [vmem:[#allocation2 + $0x160] sm:$0xff]
    %v575 = vld [vmem:[#allocation2 + $0x168] sm:$0xff]
    %v576 = vld [vmem:[#allocation2 + $0x170] sm:$0xff]
    %v577 = vld [vmem:[#allocation2 + $0x178] sm:$0xff]
    %v578 = vld [vmem:[#allocation2 + $0x180] sm:$0xff]
    %v579 = vld [vmem:[#allocation2 + $0x188] sm:$0xff]
    %v580 = vld [vmem:[#allocation2 + $0x190] sm:$0xff]
    %v581 = vld [vmem:[#allocation2 + $0x198] sm:$0xff]
    %v582 = vld [vmem:[#allocation2 + $0x1a0] sm:$0xff]
    %v583 = vld [vmem:[#allocation2 + $0x1a8] sm:$0xff]
    %v584 = vld [vmem:[#allocation2 + $0x1b0] sm:$0xff]
    %v585 = vld [vmem:[#allocation2 + $0x1b8] sm:$0xff]
    %v586 = vld [vmem:[#allocation2 + $0x1c0] sm:$0xff]
    %v587 = vld [vmem:[#allocation2 + $0x1c8] sm:$0xff]
    %v588 = vld [vmem:[#allocation2 + $0x1d0] sm:$0xff]
    %v589 = vld [vmem:[#allocation2 + $0x1d8] sm:$0xff]
    %v590 = vld [vmem:[#allocation2 + $0x1e0] sm:$0xff]
    %v591 = vld [vmem:[#allocation2 + $0x1e8] sm:$0xff]
    %v592 = vld [vmem:[#allocation2 + $0x1f0] sm:$0xff]
    %v593 = vld [vmem:[#allocation2 + $0x1f8] sm:$0xff]
    %v594 = vld [vmem:[#allocation11] sm:$0x77]
    %v595 = vld [vmem:[#allocation11 + $0x8] sm:$0x77]
    %v596 = vpack.c.bf16 %v524, %v524
    %v597 = vpack.c.bf16 %v525, %v525
    %v600 = vlaneseq
    %v601 = vshrl.u32 %v600, 7
    %v602 = vsub.s32 0, %v601
    %v603 = vrot.slane %v594, %v602
    %v604 = vlaneseq
    %v605 = vshrl.u32 %v604, 7
    %v606 = vsub.s32 4, %v605
    %v607 = vrot.slane %v594, %v606
    %v608 = vlaneseq
    %v609 = vshrl.u32 %v608, 7
    %v610 = vsub.s32 0, %v609
    %v611 = vrot.slane %v595, %v610
    %v612 = vlaneseq
    %v613 = vshrl.u32 %v612, 7
    %v614 = vsub.s32 4, %v613
    %v615 = vrot.slane %v595, %v614
    %v620 = vlaneseq
    %v621 = vshrl.u32 %v620, 7
    %v622 = vsub.s32 0, %v621
    %v623 = vrot.slane %v603, %v622
    %v624 = vlaneseq
    %v625 = vshrl.u32 %v624, 7
    %v626 = vsub.s32 0, %v625
    %v627 = vrot.slane %v607, %v626
    %v628 = vlaneseq
    %v629 = vshrl.u32 %v628, 7
    %v630 = vsub.s32 0, %v629
    %v631 = vrot.slane %v611, %v630
    %v632 = vlaneseq
    %v633 = vshrl.u32 %v632, 7
    %v634 = vsub.s32 0, %v633
    %v635 = vrot.slane %v615, %v634
    %636 = vmatprep.subr.bf16.mxu0 %v531
    %637 = vmatpush1.bf16.msra.mxu0 %v530
    %638 = vmatprep.subr.bf16.mxu0 %v535
    %639 = vmatpush1.bf16.msra.mxu0 %v534
    %640 = vmatprep.subr.bf16.mxu0 %v539
    %641 = vmatpush1.bf16.msra.mxu0 %v538
    %642 = vmatprep.subr.bf16.mxu0 %v543
    %643 = vmatpush1.bf16.msra.mxu0 %v542
    %644 = vmatprep.subr.bf16.mxu0 %v547
    %645 = vmatpush1.bf16.msra.mxu0 %v546
    %646 = vmatprep.subr.bf16.mxu0 %v551
    %647 = vmatpush1.bf16.msra.mxu0 %v550
    %648 = vmatprep.subr.bf16.mxu0 %v555
    %649 = vmatpush1.bf16.msra.mxu0 %v554
    %650 = vmatprep.subr.bf16.mxu0 %v559
    %651 = vmatpush1.bf16.msra.mxu0 %v558
    %652 = vmatprep.subr.bf16.mxu0 %v563
    %653 = vmatpush1.bf16.msra.mxu0 %v562
    %654 = vmatprep.subr.bf16.mxu0 %v567
    %655 = vmatpush1.bf16.msra.mxu0 %v566
    %656 = vmatprep.subr.bf16.mxu0 %v571
    %657 = vmatpush1.bf16.msra.mxu0 %v570
    %658 = vmatprep.subr.bf16.mxu0 %v575
    %659 = vmatpush1.bf16.msra.mxu0 %v574
    %660 = vmatprep.subr.bf16.mxu0 %v579
    %661 = vmatpush1.bf16.msra.mxu0 %v578
    %662 = vmatprep.subr.bf16.mxu0 %v583
    %663 = vmatpush1.bf16.msra.mxu0 %v582
    %664 = vmatprep.subr.bf16.mxu0 %v587
    %665 = vmatpush1.bf16.msra.mxu0 %v586
    %666 = vmatprep.subr.bf16.mxu0 %v591
    %667 = vmatpush1.bf16.msra.mxu0 %v590
    %668 = vmatprep.mubr.bf16.mxu0 %v597
    %669 = vmatmul.mubr.bf16.gmra.mrb[0].mxu0 %v596
    %v670 = vpop.f32.mrb[0].mxu0
    %v671 = vadd.f32 %v623, %v670
    %v672 = vpop.f32.mrb[0].mxu0
    %v673 = vadd.f32 %v627, %v672
    %v674 = vpop.f32.mrb[0].mxu0
    %v675 = vpop.f32.mrb[0].mxu0
    %676 = vdwg.mxu0
    %677 = vmatprep.subr.bf16.mxu0 %v533
    %678 = vmatpush1.bf16.msra.mxu0 %v532
    %679 = vmatprep.subr.bf16.mxu0 %v537
    %680 = vmatpush1.bf16.msra.mxu0 %v536
    %681 = vmatprep.subr.bf16.mxu0 %v541
    %682 = vmatpush1.bf16.msra.mxu0 %v540
    %683 = vmatprep.subr.bf16.mxu0 %v545
    %684 = vmatpush1.bf16.msra.mxu0 %v544
    %685 = vmatprep.subr.bf16.mxu0 %v549
    %686 = vmatpush1.bf16.msra.mxu0 %v548
    %687 = vmatprep.subr.bf16.mxu0 %v553
    %688 = vmatpush1.bf16.msra.mxu0 %v552
    %689 = vmatprep.subr.bf16.mxu0 %v557
    %690 = vmatpush1.bf16.msra.mxu0 %v556
    %691 = vmatprep.subr.bf16.mxu0 %v561
    %692 = vmatpush1.bf16.msra.mxu0 %v560
    %693 = vmatprep.subr.bf16.mxu0 %v565
    %694 = vmatpush1.bf16.msra.mxu0 %v564
    %695 = vmatprep.subr.bf16.mxu0 %v569
    %696 = vmatpush1.bf16.msra.mxu0 %v568
    %697 = vmatprep.subr.bf16.mxu0 %v573
    %698 = vmatpush1.bf16.msra.mxu0 %v572
    %699 = vmatprep.subr.bf16.mxu0 %v577
    %700 = vmatpush1.bf16.msra.mxu0 %v576
    %701 = vmatprep.subr.bf16.mxu0 %v581
    %702 = vmatpush1.bf16.msra.mxu0 %v580
    %703 = vmatprep.subr.bf16.mxu0 %v585
    %704 = vmatpush1.bf16.msra.mxu0 %v584
    %705 = vmatprep.subr.bf16.mxu0 %v589
    %706 = vmatpush1.bf16.msra.mxu0 %v588
    %707 = vmatprep.subr.bf16.mxu0 %v593
    %708 = vmatpush1.bf16.msra.mxu0 %v592
    %709 = vmatprep.mubr.bf16.mxu0 %v597
    %710 = vmatmul.mubr.bf16.gmra.mrb[0].mxu0 %v596
    %v711 = vpop.f32.mrb[0].mxu0
    %v712 = vadd.f32 %v631, %v711
    %v713 = vpop.f32.mrb[0].mxu0
    %v714 = vadd.f32 %v635, %v713
    %v715 = vpop.f32.mrb[0].mxu0
    %v716 = vpop.f32.mrb[0].mxu0
    %717 = vdwg.mxu0
    %v718 = vrot.slane %v671, 4
    %v719 = vadd.f32 %v671, %v718
    %v720 = vrot.slane %v719, 2
    %v721 = vadd.f32 %v719, %v720
    %v722 = vrot.slane %v721, 1
    %v723 = vadd.f32 %v721, %v722
    %v724 = vrot.slane %v673, 4
    %v725 = vadd.f32 %v673, %v724
    %v726 = vrot.slane %v725, 2
    %v727 = vadd.f32 %v725, %v726
    %v728 = vrot.slane %v727, 1
    %v729 = vadd.f32 %v727, %v728
    %v730 = vrot.slane %v712, 4
    %v731 = vadd.f32 %v712, %v730
    %v732 = vrot.slane %v731, 2
    %v733 = vadd.f32 %v731, %v732
    %v734 = vrot.slane %v733, 1
    %v735 = vadd.f32 %v733, %v734
    %v736 = vrot.slane %v714, 4
    %v737 = vadd.f32 %v714, %v736
    %v738 = vrot.slane %v737, 2
    %v739 = vadd.f32 %v737, %v738
    %v740 = vrot.slane %v739, 1
    %v741 = vadd.f32 %v739, %v740
    %v742 = vmul.f32 %v723, %v441
    %v743 = vmul.f32 %v729, %v441
    %v744 = vmul.f32 %v735, %v441
    %v745 = vmul.f32 %v741, %v441
    %v746 = vsub.f32 %v671, %v742
    %v747 = vsub.f32 %v673, %v743
    %v748 = vsub.f32 %v712, %v744
    %v749 = vsub.f32 %v714, %v745
    %v750 = vmul.f32 %v746, %v746
    %v751 = vmul.f32 %v747, %v747
    %v752 = vmul.f32 %v748, %v748
    %v753 = vmul.f32 %v749, %v749
    %v754 = vrot.slane %v750, 4
    %v755 = vadd.f32 %v750, %v754
    %v756 = vrot.slane %v755, 2
    %v757 = vadd.f32 %v755, %v756
    %v758 = vrot.slane %v757, 1
    %v759 = vadd.f32 %v757, %v758
    %v760 = vrot.slane %v751, 4
    %v761 = vadd.f32 %v751, %v760
    %v762 = vrot.slane %v761, 2
    %v763 = vadd.f32 %v761, %v762
    %v764 = vrot.slane %v763, 1
    %v765 = vadd.f32 %v763, %v764
    %v766 = vrot.slane %v752, 4
    %v767 = vadd.f32 %v752, %v766
    %v768 = vrot.slane %v767, 2
    %v769 = vadd.f32 %v767, %v768
    %v770 = vrot.slane %v769, 1
    %v771 = vadd.f32 %v769, %v770
    %v772 = vrot.slane %v753, 4
    %v773 = vadd.f32 %v753, %v772
    %v774 = vrot.slane %v773, 2
    %v775 = vadd.f32 %v773, %v774
    %v776 = vrot.slane %v775, 1
    %v777 = vadd.f32 %v775, %v776
    %v778 = vmul.f32 %v759, %v441
    %v779 = vmul.f32 %v765, %v441
    %v780 = vmul.f32 %v771, %v441
    %v781 = vmul.f32 %v777, %v441
    %v782 = vadd.f32 %v778, 0.8
    %v783 = vadd.f32 %v779, 0.8
    %v784 = vadd.f32 %v780, 0.8
    %v785 = vadd.f32 %v781, 0.8
    %v786 = vrsqrt.pop %v782
    %v787 = vrsqrt.pop %v783
    %v788 = vrsqrt.pop %v784
    %v789 = vrsqrt.pop %v785
    %v794 = vcombine.low %v786, %v787
    %v795 = vcombine.low %v788, %v789
    %v796 = vrot.slane %v794, 7
    %v797 = vrot.slane %v795, 7
    %v800 = vmul.f32 %v594, %v796
    %v801 = vmul.f32 %v595, %v797
    %v804 = vlaneseq
    %v805 = vshrl.u32 %v804, 7
    %v806 = vsub.s32 1, %v805
    %v807 = vrot.slane %v800, %v806
    %v808 = vlaneseq
    %v809 = vshrl.u32 %v808, 7
    %v810 = vsub.s32 5, %v809
    %v811 = vrot.slane %v800, %v810
    %v812 = vlaneseq
    %v813 = vshrl.u32 %v812, 7
    %v814 = vsub.s32 1, %v813
    %v815 = vrot.slane %v801, %v814
    %v816 = vlaneseq
    %v817 = vshrl.u32 %v816, 7
    %v818 = vsub.s32 5, %v817
    %v819 = vrot.slane %v801, %v818
    %v824 = vmul.f32 %v742, %v807
    %v825 = vmul.f32 %v743, %v811
    %v826 = vmul.f32 %v744, %v815
    %v827 = vmul.f32 %v745, %v819
    %v832 = vcombine.low %v824, %v825
    %v833 = vcombine.low %v826, %v827
    %v834 = vrot.slane %v832, 6
    %v835 = vrot.slane %v833, 6
    %v838 = vsub.f32 %v594, %v834
    %v839 = vsub.f32 %v595, %v835
    %v840 = vlaneseq
    %v841 = vshrl.u32 %v840, 7
    %v842 = vsub.s32 1, %v841
    %v843 = vrot.slane %v807, %v842
    %v844 = vlaneseq
    %v845 = vshrl.u32 %v844, 7
    %v846 = vsub.s32 1, %v845
    %v847 = vrot.slane %v811, %v846
    %v848 = vlaneseq
    %v849 = vshrl.u32 %v848, 7
    %v850 = vsub.s32 1, %v849
    %v851 = vrot.slane %v815, %v850
    %v852 = vlaneseq
    %v853 = vshrl.u32 %v852, 7
    %v854 = vsub.s32 1, %v853
    %v855 = vrot.slane %v819, %v854
    %v856 = vmul.f32 %v671, %v843
    %v857 = vmul.f32 %v673, %v847
    %v858 = vmul.f32 %v712, %v851
    %v859 = vmul.f32 %v714, %v855
    %v862 = vlaneseq
    %v863 = vshrl.u32 %v862, 7
    %v864 = vsub.s32 2, %v863
    %v865 = vrot.slane %v838, %v864
    %v866 = vlaneseq
    %v867 = vshrl.u32 %v866, 7
    %v868 = vsub.s32 6, %v867
    %v869 = vrot.slane %v838, %v868
    %v870 = vlaneseq
    %v871 = vshrl.u32 %v870, 7
    %v872 = vsub.s32 2, %v871
    %v873 = vrot.slane %v839, %v872
    %v874 = vlaneseq
    %v875 = vshrl.u32 %v874, 7
    %v876 = vsub.s32 6, %v875
    %v877 = vrot.slane %v839, %v876
    %v882 = vlaneseq
    %v883 = vshrl.u32 %v882, 7
    %v884 = vsub.s32 2, %v883
    %v885 = vrot.slane %v865, %v884
    %v886 = vlaneseq
    %v887 = vshrl.u32 %v886, 7
    %v888 = vsub.s32 2, %v887
    %v889 = vrot.slane %v869, %v888
    %v890 = vlaneseq
    %v891 = vshrl.u32 %v890, 7
    %v892 = vsub.s32 2, %v891
    %v893 = vrot.slane %v873, %v892
    %v894 = vlaneseq
    %v895 = vshrl.u32 %v894, 7
    %v896 = vsub.s32 2, %v895
    %v897 = vrot.slane %v877, %v896
    %v898 = vadd.f32 %v856, %v885
    %v899 = vadd.f32 %v857, %v889
    %v900 = vadd.f32 %v858, %v893
    %v901 = vadd.f32 %v859, %v897
    %v902 = vmul.f32 %v898, 0.2
    %v903 = vmul.f32 %v899, 0.2
    %v904 = vmul.f32 %v900, 0.2
    %v905 = vmul.f32 %v901, 0.2
    %v906 = vmax.f32 %v898, %v902
    %v907 = vmax.f32 %v899, %v903
    %v908 = vmax.f32 %v900, %v904
    %v909 = vmax.f32 %v901, %v905
    %s910 = smul.u32 4, 64
    %s911 = smul.u32 %s910, 8
    %s912 = sshll.u32 %s911, 4
    %913 = dma.done %s135, %s912
    %v914 = vld [vmem:[#allocation3] sm:$0xff]
    %v915 = vld [vmem:[#allocation3 + $0x8] sm:$0xff]
    %v916 = vld [vmem:[#allocation3 + $0x10] sm:$0xff]
    %v917 = vld [vmem:[#allocation3 + $0x18] sm:$0xff]
    %v918 = vld [vmem:[#allocation3 + $0x20] sm:$0xff]
    %v919 = vld [vmem:[#allocation3 + $0x28] sm:$0xff]
    %v920 = vld [vmem:[#allocation3 + $0x30] sm:$0xff]
    %v921 = vld [vmem:[#allocation3 + $0x38] sm:$0xff]
    %v922 = vld [vmem:[#allocation3 + $0x40] sm:$0xff]
    %v923 = vld [vmem:[#allocation3 + $0x48] sm:$0xff]
    %v924 = vld [vmem:[#allocation3 + $0x50] sm:$0xff]
    %v925 = vld [vmem:[#allocation3 + $0x58] sm:$0xff]
    %v926 = vld [vmem:[#allocation3 + $0x60] sm:$0xff]
    %v927 = vld [vmem:[#allocation3 + $0x68] sm:$0xff]
    %v928 = vld [vmem:[#allocation3 + $0x70] sm:$0xff]
    %v929 = vld [vmem:[#allocation3 + $0x78] sm:$0xff]
    %v930 = vld [vmem:[#allocation3 + $0x80] sm:$0xff]
    %v931 = vld [vmem:[#allocation3 + $0x88] sm:$0xff]
    %v932 = vld [vmem:[#allocation3 + $0x90] sm:$0xff]
    %v933 = vld [vmem:[#allocation3 + $0x98] sm:$0xff]
    %v934 = vld [vmem:[#allocation3 + $0xa0] sm:$0xff]
    %v935 = vld [vmem:[#allocation3 + $0xa8] sm:$0xff]
    %v936 = vld [vmem:[#allocation3 + $0xb0] sm:$0xff]
    %v937 = vld [vmem:[#allocation3 + $0xb8] sm:$0xff]
    %v938 = vld [vmem:[#allocation3 + $0xc0] sm:$0xff]
    %v939 = vld [vmem:[#allocation3 + $0xc8] sm:$0xff]
    %v940 = vld [vmem:[#allocation3 + $0xd0] sm:$0xff]
    %v941 = vld [vmem:[#allocation3 + $0xd8] sm:$0xff]
    %v942 = vld [vmem:[#allocation3 + $0xe0] sm:$0xff]
    %v943 = vld [vmem:[#allocation3 + $0xe8] sm:$0xff]
    %v944 = vld [vmem:[#allocation3 + $0xf0] sm:$0xff]
    %v945 = vld [vmem:[#allocation3 + $0xf8] sm:$0xff]
    %v946 = vld [vmem:[#allocation3 + $0x100] sm:$0xff]
    %v947 = vld [vmem:[#allocation3 + $0x108] sm:$0xff]
    %v948 = vld [vmem:[#allocation3 + $0x110] sm:$0xff]
    %v949 = vld [vmem:[#allocation3 + $0x118] sm:$0xff]
    %v950 = vld [vmem:[#allocation3 + $0x120] sm:$0xff]
    %v951 = vld [vmem:[#allocation3 + $0x128] sm:$0xff]
    %v952 = vld [vmem:[#allocation3 + $0x130] sm:$0xff]
    %v953 = vld [vmem:[#allocation3 + $0x138] sm:$0xff]
    %v954 = vld [vmem:[#allocation3 + $0x140] sm:$0xff]
    %v955 = vld [vmem:[#allocation3 + $0x148] sm:$0xff]
    %v956 = vld [vmem:[#allocation3 + $0x150] sm:$0xff]
    %v957 = vld [vmem:[#allocation3 + $0x158] sm:$0xff]
    %v958 = vld [vmem:[#allocation3 + $0x160] sm:$0xff]
    %v959 = vld [vmem:[#allocation3 + $0x168] sm:$0xff]
    %v960 = vld [vmem:[#allocation3 + $0x170] sm:$0xff]
    %v961 = vld [vmem:[#allocation3 + $0x178] sm:$0xff]
    %v962 = vld [vmem:[#allocation3 + $0x180] sm:$0xff]
    %v963 = vld [vmem:[#allocation3 + $0x188] sm:$0xff]
    %v964 = vld [vmem:[#allocation3 + $0x190] sm:$0xff]
    %v965 = vld [vmem:[#allocation3 + $0x198] sm:$0xff]
    %v966 = vld [vmem:[#allocation3 + $0x1a0] sm:$0xff]
    %v967 = vld [vmem:[#allocation3 + $0x1a8] sm:$0xff]
    %v968 = vld [vmem:[#allocation3 + $0x1b0] sm:$0xff]
    %v969 = vld [vmem:[#allocation3 + $0x1b8] sm:$0xff]
    %v970 = vld [vmem:[#allocation3 + $0x1c0] sm:$0xff]
    %v971 = vld [vmem:[#allocation3 + $0x1c8] sm:$0xff]
    %v972 = vld [vmem:[#allocation3 + $0x1d0] sm:$0xff]
    %v973 = vld [vmem:[#allocation3 + $0x1d8] sm:$0xff]
    %v974 = vld [vmem:[#allocation3 + $0x1e0] sm:$0xff]
    %v975 = vld [vmem:[#allocation3 + $0x1e8] sm:$0xff]
    %v976 = vld [vmem:[#allocation3 + $0x1f0] sm:$0xff]
    %v977 = vld [vmem:[#allocation3 + $0x1f8] sm:$0xff]
    %v978 = vld [vmem:[#allocation3 + $0x200] sm:$0xff]
    %v979 = vld [vmem:[#allocation3 + $0x208] sm:$0xff]
    %v980 = vld [vmem:[#allocation3 + $0x210] sm:$0xff]
    %v981 = vld [vmem:[#allocation3 + $0x218] sm:$0xff]
    %v982 = vld [vmem:[#allocation3 + $0x220] sm:$0xff]
    %v983 = vld [vmem:[#allocation3 + $0x228] sm:$0xff]
    %v984 = vld [vmem:[#allocation3 + $0x230] sm:$0xff]
    %v985 = vld [vmem:[#allocation3 + $0x238] sm:$0xff]
    %v986 = vld [vmem:[#allocation3 + $0x240] sm:$0xff]
    %v987 = vld [vmem:[#allocation3 + $0x248] sm:$0xff]
    %v988 = vld [vmem:[#allocation3 + $0x250] sm:$0xff]
    %v989 = vld [vmem:[#allocation3 + $0x258] sm:$0xff]
    %v990 = vld [vmem:[#allocation3 + $0x260] sm:$0xff]
    %v991 = vld [vmem:[#allocation3 + $0x268] sm:$0xff]
    %v992 = vld [vmem:[#allocation3 + $0x270] sm:$0xff]
    %v993 = vld [vmem:[#allocation3 + $0x278] sm:$0xff]
    %v994 = vld [vmem:[#allocation3 + $0x280] sm:$0xff]
    %v995 = vld [vmem:[#allocation3 + $0x288] sm:$0xff]
    %v996 = vld [vmem:[#allocation3 + $0x290] sm:$0xff]
    %v997 = vld [vmem:[#allocation3 + $0x298] sm:$0xff]
    %v998 = vld [vmem:[#allocation3 + $0x2a0] sm:$0xff]
    %v999 = vld [vmem:[#allocation3 + $0x2a8] sm:$0xff]
    %v1000 = vld [vmem:[#allocation3 + $0x2b0] sm:$0xff]
    %v1001 = vld [vmem:[#allocation3 + $0x2b8] sm:$0xff]
    %v1002 = vld [vmem:[#allocation3 + $0x2c0] sm:$0xff]
    %v1003 = vld [vmem:[#allocation3 + $0x2c8] sm:$0xff]
    %v1004 = vld [vmem:[#allocation3 + $0x2d0] sm:$0xff]
    %v1005 = vld [vmem:[#allocation3 + $0x2d8] sm:$0xff]
    %v1006 = vld [vmem:[#allocation3 + $0x2e0] sm:$0xff]
    %v1007 = vld [vmem:[#allocation3 + $0x2e8] sm:$0xff]
    %v1008 = vld [vmem:[#allocation3 + $0x2f0] sm:$0xff]
    %v1009 = vld [vmem:[#allocation3 + $0x2f8] sm:$0xff]
    %v1010 = vld [vmem:[#allocation3 + $0x300] sm:$0xff]
    %v1011 = vld [vmem:[#allocation3 + $0x308] sm:$0xff]
    %v1012 = vld [vmem:[#allocation3 + $0x310] sm:$0xff]
    %v1013 = vld [vmem:[#allocation3 + $0x318] sm:$0xff]
    %v1014 = vld [vmem:[#allocation3 + $0x320] sm:$0xff]
    %v1015 = vld [vmem:[#allocation3 + $0x328] sm:$0xff]
    %v1016 = vld [vmem:[#allocation3 + $0x330] sm:$0xff]
    %v1017 = vld [vmem:[#allocation3 + $0x338] sm:$0xff]
    %v1018 = vld [vmem:[#allocation3 + $0x340] sm:$0xff]
    %v1019 = vld [vmem:[#allocation3 + $0x348] sm:$0xff]
    %v1020 = vld [vmem:[#allocation3 + $0x350] sm:$0xff]
    %v1021 = vld [vmem:[#allocation3 + $0x358] sm:$0xff]
    %v1022 = vld [vmem:[#allocation3 + $0x360] sm:$0xff]
    %v1023 = vld [vmem:[#allocation3 + $0x368] sm:$0xff]
    %v1024 = vld [vmem:[#allocation3 + $0x370] sm:$0xff]
    %v1025 = vld [vmem:[#allocation3 + $0x378] sm:$0xff]
    %v1026 = vld [vmem:[#allocation3 + $0x380] sm:$0xff]
    %v1027 = vld [vmem:[#allocation3 + $0x388] sm:$0xff]
    %v1028 = vld [vmem:[#allocation3 + $0x390] sm:$0xff]
    %v1029 = vld [vmem:[#allocation3 + $0x398] sm:$0xff]
    %v1030 = vld [vmem:[#allocation3 + $0x3a0] sm:$0xff]
    %v1031 = vld [vmem:[#allocation3 + $0x3a8] sm:$0xff]
    %v1032 = vld [vmem:[#allocation3 + $0x3b0] sm:$0xff]
    %v1033 = vld [vmem:[#allocation3 + $0x3b8] sm:$0xff]
    %v1034 = vld [vmem:[#allocation3 + $0x3c0] sm:$0xff]
    %v1035 = vld [vmem:[#allocation3 + $0x3c8] sm:$0xff]
    %v1036 = vld [vmem:[#allocation3 + $0x3d0] sm:$0xff]
    %v1037 = vld [vmem:[#allocation3 + $0x3d8] sm:$0xff]
    %v1038 = vld [vmem:[#allocation3 + $0x3e0] sm:$0xff]
    %v1039 = vld [vmem:[#allocation3 + $0x3e8] sm:$0xff]
    %v1040 = vld [vmem:[#allocation3 + $0x3f0] sm:$0xff]
    %v1041 = vld [vmem:[#allocation3 + $0x3f8] sm:$0xff]
    %v1042 = vld [vmem:[#allocation3 + $0x400] sm:$0xff]
    %v1043 = vld [vmem:[#allocation3 + $0x408] sm:$0xff]
    %v1044 = vld [vmem:[#allocation3 + $0x410] sm:$0xff]
    %v1045 = vld [vmem:[#allocation3 + $0x418] sm:$0xff]
    %v1046 = vld [vmem:[#allocation3 + $0x420] sm:$0xff]
    %v1047 = vld [vmem:[#allocation3 + $0x428] sm:$0xff]
    %v1048 = vld [vmem:[#allocation3 + $0x430] sm:$0xff]
    %v1049 = vld [vmem:[#allocation3 + $0x438] sm:$0xff]
    %v1050 = vld [vmem:[#allocation3 + $0x440] sm:$0xff]
    %v1051 = vld [vmem:[#allocation3 + $0x448] sm:$0xff]
    %v1052 = vld [vmem:[#allocation3 + $0x450] sm:$0xff]
    %v1053 = vld [vmem:[#allocation3 + $0x458] sm:$0xff]
    %v1054 = vld [vmem:[#allocation3 + $0x460] sm:$0xff]
    %v1055 = vld [vmem:[#allocation3 + $0x468] sm:$0xff]
    %v1056 = vld [vmem:[#allocation3 + $0x470] sm:$0xff]
    %v1057 = vld [vmem:[#allocation3 + $0x478] sm:$0xff]
    %v1058 = vld [vmem:[#allocation3 + $0x480] sm:$0xff]
    %v1059 = vld [vmem:[#allocation3 + $0x488] sm:$0xff]
    %v1060 = vld [vmem:[#allocation3 + $0x490] sm:$0xff]
    %v1061 = vld [vmem:[#allocation3 + $0x498] sm:$0xff]
    %v1062 = vld [vmem:[#allocation3 + $0x4a0] sm:$0xff]
    %v1063 = vld [vmem:[#allocation3 + $0x4a8] sm:$0xff]
    %v1064 = vld [vmem:[#allocation3 + $0x4b0] sm:$0xff]
    %v1065 = vld [vmem:[#allocation3 + $0x4b8] sm:$0xff]
    %v1066 = vld [vmem:[#allocation3 + $0x4c0] sm:$0xff]
    %v1067 = vld [vmem:[#allocation3 + $0x4c8] sm:$0xff]
    %v1068 = vld [vmem:[#allocation3 + $0x4d0] sm:$0xff]
    %v1069 = vld [vmem:[#allocation3 + $0x4d8] sm:$0xff]
    %v1070 = vld [vmem:[#allocation3 + $0x4e0] sm:$0xff]
    %v1071 = vld [vmem:[#allocation3 + $0x4e8] sm:$0xff]
    %v1072 = vld [vmem:[#allocation3 + $0x4f0] sm:$0xff]
    %v1073 = vld [vmem:[#allocation3 + $0x4f8] sm:$0xff]
    %v1074 = vld [vmem:[#allocation3 + $0x500] sm:$0xff]
    %v1075 = vld [vmem:[#allocation3 + $0x508] sm:$0xff]
    %v1076 = vld [vmem:[#allocation3 + $0x510] sm:$0xff]
    %v1077 = vld [vmem:[#allocation3 + $0x518] sm:$0xff]
    %v1078 = vld [vmem:[#allocation3 + $0x520] sm:$0xff]
    %v1079 = vld [vmem:[#allocation3 + $0x528] sm:$0xff]
    %v1080 = vld [vmem:[#allocation3 + $0x530] sm:$0xff]
    %v1081 = vld [vmem:[#allocation3 + $0x538] sm:$0xff]
    %v1082 = vld [vmem:[#allocation3 + $0x540] sm:$0xff]
    %v1083 = vld [vmem:[#allocation3 + $0x548] sm:$0xff]
    %v1084 = vld [vmem:[#allocation3 + $0x550] sm:$0xff]
    %v1085 = vld [vmem:[#allocation3 + $0x558] sm:$0xff]
    %v1086 = vld [vmem:[#allocation3 + $0x560] sm:$0xff]
    %v1087 = vld [vmem:[#allocation3 + $0x568] sm:$0xff]
    %v1088 = vld [vmem:[#allocation3 + $0x570] sm:$0xff]
    %v1089 = vld [vmem:[#allocation3 + $0x578] sm:$0xff]
    %v1090 = vld [vmem:[#allocation3 + $0x580] sm:$0xff]
    %v1091 = vld [vmem:[#allocation3 + $0x588] sm:$0xff]
    %v1092 = vld [vmem:[#allocation3 + $0x590] sm:$0xff]
    %v1093 = vld [vmem:[#allocation3 + $0x598] sm:$0xff]
    %v1094 = vld [vmem:[#allocation3 + $0x5a0] sm:$0xff]
    %v1095 = vld [vmem:[#allocation3 + $0x5a8] sm:$0xff]
    %v1096 = vld [vmem:[#allocation3 + $0x5b0] sm:$0xff]
    %v1097 = vld [vmem:[#allocation3 + $0x5b8] sm:$0xff]
    %v1098 = vld [vmem:[#allocation3 + $0x5c0] sm:$0xff]
    %v1099 = vld [vmem:[#allocation3 + $0x5c8] sm:$0xff]
    %v1100 = vld [vmem:[#allocation3 + $0x5d0] sm:$0xff]
    %v1101 = vld [vmem:[#allocation3 + $0x5d8] sm:$0xff]
    %v1102 = vld [vmem:[#allocation3 + $0x5e0] sm:$0xff]
    %v1103 = vld [vmem:[#allocation3 + $0x5e8] sm:$0xff]
    %v1104 = vld [vmem:[#allocation3 + $0x5f0] sm:$0xff]
    %v1105 = vld [vmem:[#allocation3 + $0x5f8] sm:$0xff]
    %v1106 = vld [vmem:[#allocation3 + $0x600] sm:$0xff]
    %v1107 = vld [vmem:[#allocation3 + $0x608] sm:$0xff]
    %v1108 = vld [vmem:[#allocation3 + $0x610] sm:$0xff]
    %v1109 = vld [vmem:[#allocation3 + $0x618] sm:$0xff]
    %v1110 = vld [vmem:[#allocation3 + $0x620] sm:$0xff]
    %v1111 = vld [vmem:[#allocation3 + $0x628] sm:$0xff]
    %v1112 = vld [vmem:[#allocation3 + $0x630] sm:$0xff]
    %v1113 = vld [vmem:[#allocation3 + $0x638] sm:$0xff]
    %v1114 = vld [vmem:[#allocation3 + $0x640] sm:$0xff]
    %v1115 = vld [vmem:[#allocation3 + $0x648] sm:$0xff]
    %v1116 = vld [vmem:[#allocation3 + $0x650] sm:$0xff]
    %v1117 = vld [vmem:[#allocation3 + $0x658] sm:$0xff]
    %v1118 = vld [vmem:[#allocation3 + $0x660] sm:$0xff]
    %v1119 = vld [vmem:[#allocation3 + $0x668] sm:$0xff]
    %v1120 = vld [vmem:[#allocation3 + $0x670] sm:$0xff]
    %v1121 = vld [vmem:[#allocation3 + $0x678] sm:$0xff]
    %v1122 = vld [vmem:[#allocation3 + $0x680] sm:$0xff]
    %v1123 = vld [vmem:[#allocation3 + $0x688] sm:$0xff]
    %v1124 = vld [vmem:[#allocation3 + $0x690] sm:$0xff]
    %v1125 = vld [vmem:[#allocation3 + $0x698] sm:$0xff]
    %v1126 = vld [vmem:[#allocation3 + $0x6a0] sm:$0xff]
    %v1127 = vld [vmem:[#allocation3 + $0x6a8] sm:$0xff]
    %v1128 = vld [vmem:[#allocation3 + $0x6b0] sm:$0xff]
    %v1129 = vld [vmem:[#allocation3 + $0x6b8] sm:$0xff]
    %v1130 = vld [vmem:[#allocation3 + $0x6c0] sm:$0xff]
    %v1131 = vld [vmem:[#allocation3 + $0x6c8] sm:$0xff]
    %v1132 = vld [vmem:[#allocation3 + $0x6d0] sm:$0xff]
    %v1133 = vld [vmem:[#allocation3 + $0x6d8] sm:$0xff]
    %v1134 = vld [vmem:[#allocation3 + $0x6e0] sm:$0xff]
    %v1135 = vld [vmem:[#allocation3 + $0x6e8] sm:$0xff]
    %v1136 = vld [vmem:[#allocation3 + $0x6f0] sm:$0xff]
    %v1137 = vld [vmem:[#allocation3 + $0x6f8] sm:$0xff]
    %v1138 = vld [vmem:[#allocation3 + $0x700] sm:$0xff]
    %v1139 = vld [vmem:[#allocation3 + $0x708] sm:$0xff]
    %v1140 = vld [vmem:[#allocation3 + $0x710] sm:$0xff]
    %v1141 = vld [vmem:[#allocation3 + $0x718] sm:$0xff]
    %v1142 = vld [vmem:[#allocation3 + $0x720] sm:$0xff]
    %v1143 = vld [vmem:[#allocation3 + $0x728] sm:$0xff]
    %v1144 = vld [vmem:[#allocation3 + $0x730] sm:$0xff]
    %v1145 = vld [vmem:[#allocation3 + $0x738] sm:$0xff]
    %v1146 = vld [vmem:[#allocation3 + $0x740] sm:$0xff]
    %v1147 = vld [vmem:[#allocation3 + $0x748] sm:$0xff]
    %v1148 = vld [vmem:[#allocation3 + $0x750] sm:$0xff]
    %v1149 = vld [vmem:[#allocation3 + $0x758] sm:$0xff]
    %v1150 = vld [vmem:[#allocation3 + $0x760] sm:$0xff]
    %v1151 = vld [vmem:[#allocation3 + $0x768] sm:$0xff]
    %v1152 = vld [vmem:[#allocation3 + $0x770] sm:$0xff]
    %v1153 = vld [vmem:[#allocation3 + $0x778] sm:$0xff]
    %v1154 = vld [vmem:[#allocation3 + $0x780] sm:$0xff]
    %v1155 = vld [vmem:[#allocation3 + $0x788] sm:$0xff]
    %v1156 = vld [vmem:[#allocation3 + $0x790] sm:$0xff]
    %v1157 = vld [vmem:[#allocation3 + $0x798] sm:$0xff]
    %v1158 = vld [vmem:[#allocation3 + $0x7a0] sm:$0xff]
    %v1159 = vld [vmem:[#allocation3 + $0x7a8] sm:$0xff]
    %v1160 = vld [vmem:[#allocation3 + $0x7b0] sm:$0xff]
    %v1161 = vld [vmem:[#allocation3 + $0x7b8] sm:$0xff]
    %v1162 = vld [vmem:[#allocation3 + $0x7c0] sm:$0xff]
    %v1163 = vld [vmem:[#allocation3 + $0x7c8] sm:$0xff]
    %v1164 = vld [vmem:[#allocation3 + $0x7d0] sm:$0xff]
    %v1165 = vld [vmem:[#allocation3 + $0x7d8] sm:$0xff]
    %v1166 = vld [vmem:[#allocation3 + $0x7e0] sm:$0xff]
    %v1167 = vld [vmem:[#allocation3 + $0x7e8] sm:$0xff]
    %v1168 = vld [vmem:[#allocation3 + $0x7f0] sm:$0xff]
    %v1169 = vld [vmem:[#allocation3 + $0x7f8] sm:$0xff]
    %v1170 = vld [vmem:[%s9] sm:$0x77]
    %v1171 = vld [vmem:[%s9 + $0x8] sm:$0x77]
    %v1172 = vld [vmem:[%s9 + $0x10] sm:$0x77]
    %v1173 = vld [vmem:[%s9 + $0x18] sm:$0x77]
    %v1174 = vpack.c.bf16 %v906, %v906
    %v1175 = vpack.c.bf16 %v907, %v907
    %v1176 = vpack.c.bf16 %v908, %v908
    %v1177 = vpack.c.bf16 %v909, %v909
    %v1182 = vlaneseq
    %v1183 = vshrl.u32 %v1182, 7
    %v1184 = vsub.s32 0, %v1183
    %v1185 = vrot.slane %v1170, %v1184
    %v1186 = vlaneseq
    %v1187 = vshrl.u32 %v1186, 7
    %v1188 = vsub.s32 4, %v1187
    %v1189 = vrot.slane %v1170, %v1188
    %v1190 = vlaneseq
    %v1191 = vshrl.u32 %v1190, 7
    %v1192 = vsub.s32 0, %v1191
    %v1193 = vrot.slane %v1171, %v1192
    %v1194 = vlaneseq
    %v1195 = vshrl.u32 %v1194, 7
    %v1196 = vsub.s32 4, %v1195
    %v1197 = vrot.slane %v1171, %v1196
    %v1198 = vlaneseq
    %v1199 = vshrl.u32 %v1198, 7
    %v1200 = vsub.s32 0, %v1199
    %v1201 = vrot.slane %v1172, %v1200
    %v1202 = vlaneseq
    %v1203 = vshrl.u32 %v1202, 7
    %v1204 = vsub.s32 4, %v1203
    %v1205 = vrot.slane %v1172, %v1204
    %v1206 = vlaneseq
    %v1207 = vshrl.u32 %v1206, 7
    %v1208 = vsub.s32 0, %v1207
    %v1209 = vrot.slane %v1173, %v1208
    %v1210 = vlaneseq
    %v1211 = vshrl.u32 %v1210, 7
    %v1212 = vsub.s32 4, %v1211
    %v1213 = vrot.slane %v1173, %v1212
    %v1222 = vlaneseq
    %v1223 = vshrl.u32 %v1222, 7
    %v1224 = vsub.s32 0, %v1223
    %v1225 = vrot.slane %v1185, %v1224
    %v1226 = vlaneseq
    %v1227 = vshrl.u32 %v1226, 7
    %v1228 = vsub.s32 0, %v1227
    %v1229 = vrot.slane %v1189, %v1228
    %v1230 = vlaneseq
    %v1231 = vshrl.u32 %v1230, 7
    %v1232 = vsub.s32 0, %v1231
    %v1233 = vrot.slane %v1193, %v1232
    %v1234 = vlaneseq
    %v1235 = vshrl.u32 %v1234, 7
    %v1236 = vsub.s32 0, %v1235
    %v1237 = vrot.slane %v1197, %v1236
    %v1238 = vlaneseq
    %v1239 = vshrl.u32 %v1238, 7
    %v1240 = vsub.s32 0, %v1239
    %v1241 = vrot.slane %v1201, %v1240
    %v1242 = vlaneseq
    %v1243 = vshrl.u32 %v1242, 7
    %v1244 = vsub.s32 0, %v1243
    %v1245 = vrot.slane %v1205, %v1244
    %v1246 = vlaneseq
    %v1247 = vshrl.u32 %v1246, 7
    %v1248 = vsub.s32 0, %v1247
    %v1249 = vrot.slane %v1209, %v1248
    %v1250 = vlaneseq
    %v1251 = vshrl.u32 %v1250, 7
    %v1252 = vsub.s32 0, %v1251
    %v1253 = vrot.slane %v1213, %v1252
    %1254 = vmatprep.subr.bf16.mxu0 %v915
    %1255 = vmatpush1.bf16.msra.mxu0 %v914
    %1256 = vmatprep.subr.bf16.mxu0 %v923
    %1257 = vmatpush1.bf16.msra.mxu0 %v922
    %1258 = vmatprep.subr.bf16.mxu0 %v931
    %1259 = vmatpush1.bf16.msra.mxu0 %v930
    %1260 = vmatprep.subr.bf16.mxu0 %v939
    %1261 = vmatpush1.bf16.msra.mxu0 %v938
    %1262 = vmatprep.subr.bf16.mxu0 %v947
    %1263 = vmatpush1.bf16.msra.mxu0 %v946
    %1264 = vmatprep.subr.bf16.mxu0 %v955
    %1265 = vmatpush1.bf16.msra.mxu0 %v954
    %1266 = vmatprep.subr.bf16.mxu0 %v963
    %1267 = vmatpush1.bf16.msra.mxu0 %v962
    %1268 = vmatprep.subr.bf16.mxu0 %v971
    %1269 = vmatpush1.bf16.msra.mxu0 %v970
    %1270 = vmatprep.subr.bf16.mxu0 %v979
    %1271 = vmatpush1.bf16.msra.mxu0 %v978
    %1272 = vmatprep.subr.bf16.mxu0 %v987
    %1273 = vmatpush1.bf16.msra.mxu0 %v986
    %1274 = vmatprep.subr.bf16.mxu0 %v995
    %1275 = vmatpush1.bf16.msra.mxu0 %v994
    %1276 = vmatprep.subr.bf16.mxu0 %v1003
    %1277 = vmatpush1.bf16.msra.mxu0 %v1002
    %1278 = vmatprep.subr.bf16.mxu0 %v1011
    %1279 = vmatpush1.bf16.msra.mxu0 %v1010
    %1280 = vmatprep.subr.bf16.mxu0 %v1019
    %1281 = vmatpush1.bf16.msra.mxu0 %v1018
    %1282 = vmatprep.subr.bf16.mxu0 %v1027
    %1283 = vmatpush1.bf16.msra.mxu0 %v1026
    %1284 = vmatprep.subr.bf16.mxu0 %v1035
    %1285 = vmatpush1.bf16.msra.mxu0 %v1034
    %1286 = vmatprep.mubr.bf16.mxu0 %v1175
    %1287 = vmatmul.mubr.bf16.gmra.mrb[0].mxu0 %v1174
    %v1288 = vpop.f32.mrb[0].mxu0
    %v1289 = vadd.f32 %v1225, %v1288
    %v1290 = vpop.f32.mrb[0].mxu0
    %v1291 = vadd.f32 %v1229, %v1290
    %v1292 = vpop.f32.mrb[0].mxu0
    %v1293 = vpop.f32.mrb[0].mxu0
    %1294 = vdwg.mxu0
    %1295 = vmatprep.subr.bf16.mxu0 %v1043
    %1296 = vmatpush1.bf16.msra.mxu0 %v1042
    %1297 = vmatprep.subr.bf16.mxu0 %v1051
    %1298 = vmatpush1.bf16.msra.mxu0 %v1050
    %1299 = vmatprep.subr.bf16.mxu0 %v1059
    %1300 = vmatpush1.bf16.msra.mxu0 %v1058
    %1301 = vmatprep.subr.bf16.mxu0 %v1067
    %1302 = vmatpush1.bf16.msra.mxu0 %v1066
    %1303 = vmatprep.subr.bf16.mxu0 %v1075
    %1304 = vmatpush1.bf16.msra.mxu0 %v1074
    %1305 = vmatprep.subr.bf16.mxu0 %v1083
    %1306 = vmatpush1.bf16.msra.mxu0 %v1082
    %1307 = vmatprep.subr.bf16.mxu0 %v1091
    %1308 = vmatpush1.bf16.msra.mxu0 %v1090
    %1309 = vmatprep.subr.bf16.mxu0 %v1099
    %1310 = vmatpush1.bf16.msra.mxu0 %v1098
    %1311 = vmatprep.subr.bf16.mxu0 %v1107
    %1312 = vmatpush1.bf16.msra.mxu0 %v1106
    %1313 = vmatprep.subr.bf16.mxu0 %v1115
    %1314 = vmatpush1.bf16.msra.mxu0 %v1114
    %1315 = vmatprep.subr.bf16.mxu0 %v1123
    %1316 = vmatpush1.bf16.msra.mxu0 %v1122
    %1317 = vmatprep.subr.bf16.mxu0 %v1131
    %1318 = vmatpush1.bf16.msra.mxu0 %v1130
    %1319 = vmatprep.subr.bf16.mxu0 %v1139
    %1320 = vmatpush1.bf16.msra.mxu0 %v1138
    %1321 = vmatprep.subr.bf16.mxu0 %v1147
    %1322 = vmatpush1.bf16.msra.mxu0 %v1146
    %1323 = vmatprep.subr.bf16.mxu0 %v1155
    %1324 = vmatpush1.bf16.msra.mxu0 %v1154
    %1325 = vmatprep.subr.bf16.mxu0 %v1163
    %1326 = vmatpush1.bf16.msra.mxu0 %v1162
    %1327 = vmatprep.mubr.bf16.mxu0 %v1177
    %1328 = vmatmul.mubr.bf16.gmra.mrb[0].mxu0 %v1176
    %v1329 = vpop.f32.mrb[0].mxu0
    %v1330 = vadd.f32 %v1289, %v1329
    %v1331 = vpop.f32.mrb[0].mxu0
    %v1332 = vadd.f32 %v1291, %v1331
    %v1333 = vpop.f32.mrb[0].mxu0
    %v1334 = vpop.f32.mrb[0].mxu0
    %1335 = vdwg.mxu0
    %1336 = vmatprep.subr.bf16.mxu0 %v917
    %1337 = vmatpush1.bf16.msra.mxu0 %v916
    %1338 = vmatprep.subr.bf16.mxu0 %v925
    %1339 = vmatpush1.bf16.msra.mxu0 %v924
    %1340 = vmatprep.subr.bf16.mxu0 %v933
    %1341 = vmatpush1.bf16.msra.mxu0 %v932
    %1342 = vmatprep.subr.bf16.mxu0 %v941
    %1343 = vmatpush1.bf16.msra.mxu0 %v940
    %1344 = vmatprep.subr.bf16.mxu0 %v949
    %1345 = vmatpush1.bf16.msra.mxu0 %v948
    %1346 = vmatprep.subr.bf16.mxu0 %v957
    %1347 = vmatpush1.bf16.msra.mxu0 %v956
    %1348 = vmatprep.subr.bf16.mxu0 %v965
    %1349 = vmatpush1.bf16.msra.mxu0 %v964
    %1350 = vmatprep.subr.bf16.mxu0 %v973
    %1351 = vmatpush1.bf16.msra.mxu0 %v972
    %1352 = vmatprep.subr.bf16.mxu0 %v981
    %1353 = vmatpush1.bf16.msra.mxu0 %v980
    %1354 = vmatprep.subr.bf16.mxu0 %v989
    %1355 = vmatpush1.bf16.msra.mxu0 %v988
    %1356 = vmatprep.subr.bf16.mxu0 %v997
    %1357 = vmatpush1.bf16.msra.mxu0 %v996
    %1358 = vmatprep.subr.bf16.mxu0 %v1005
    %1359 = vmatpush1.bf16.msra.mxu0 %v1004
    %1360 = vmatprep.subr.bf16.mxu0 %v1013
    %1361 = vmatpush1.bf16.msra.mxu0 %v1012
    %1362 = vmatprep.subr.bf16.mxu0 %v1021
    %1363 = vmatpush1.bf16.msra.mxu0 %v1020
    %1364 = vmatprep.subr.bf16.mxu0 %v1029
    %1365 = vmatpush1.bf16.msra.mxu0 %v1028
    %1366 = vmatprep.subr.bf16.mxu0 %v1037
    %1367 = vmatpush1.bf16.msra.mxu0 %v1036
    %1368 = vmatprep.mubr.bf16.mxu0 %v1175
    %1369 = vmatmul.mubr.bf16.gmra.mrb[0].mxu0 %v1174
    %v1370 = vpop.f32.mrb[0].mxu0
    %v1371 = vadd.f32 %v1233, %v1370
    %v1372 = vpop.f32.mrb[0].mxu0
    %v1373 = vadd.f32 %v1237, %v1372
    %v1374 = vpop.f32.mrb[0].mxu0
    %v1375 = vpop.f32.mrb[0].mxu0
    %1376 = vdwg.mxu0
    %1377 = vmatprep.subr.bf16.mxu0 %v1045
    %1378 = vmatpush1.bf16.msra.mxu0 %v1044
    %1379 = vmatprep.subr.bf16.mxu0 %v1053
    %1380 = vmatpush1.bf16.msra.mxu0 %v1052
    %1381 = vmatprep.subr.bf16.mxu0 %v1061
    %1382 = vmatpush1.bf16.msra.mxu0 %v1060
    %1383 = vmatprep.subr.bf16.mxu0 %v1069
    %1384 = vmatpush1.bf16.msra.mxu0 %v1068
    %1385 = vmatprep.subr.bf16.mxu0 %v1077
    %1386 = vmatpush1.bf16.msra.mxu0 %v1076
    %1387 = vmatprep.subr.bf16.mxu0 %v1085
    %1388 = vmatpush1.bf16.msra.mxu0 %v1084
    %1389 = vmatprep.subr.bf16.mxu0 %v1093
    %1390 = vmatpush1.bf16.msra.mxu0 %v1092
    %1391 = vmatprep.subr.bf16.mxu0 %v1101
    %1392 = vmatpush1.bf16.msra.mxu0 %v1100
    %1393 = vmatprep.subr.bf16.mxu0 %v1109
    %1394 = vmatpush1.bf16.msra.mxu0 %v1108
    %1395 = vmatprep.subr.bf16.mxu0 %v1117
    %1396 = vmatpush1.bf16.msra.mxu0 %v1116
    %1397 = vmatprep.subr.bf16.mxu0 %v1125
    %1398 = vmatpush1.bf16.msra.mxu0 %v1124
    %1399 = vmatprep.subr.bf16.mxu0 %v1133
    %1400 = vmatpush1.bf16.msra.mxu0 %v1132
    %1401 = vmatprep.subr.bf16.mxu0 %v1141
    %1402 = vmatpush1.bf16.msra.mxu0 %v1140
    %1403 = vmatprep.subr.bf16.mxu0 %v1149
    %1404 = vmatpush1.bf16.msra.mxu0 %v1148
    %1405 = vmatprep.subr.bf16.mxu0 %v1157
    %1406 = vmatpush1.bf16.msra.mxu0 %v1156
    %1407 = vmatprep.subr.bf16.mxu0 %v1165
    %1408 = vmatpush1.bf16.msra.mxu0 %v1164
    %1409 = vmatprep.mubr.bf16.mxu0 %v1177
    %1410 = vmatmul.mubr.bf16.gmra.mrb[0].mxu0 %v1176
    %v1411 = vpop.f32.mrb[0].mxu0
    %v1412 = vadd.f32 %v1371, %v1411
    %v1413 = vpop.f32.mrb[0].mxu0
    %v1414 = vadd.f32 %v1373, %v1413
    %v1415 = vpop.f32.mrb[0].mxu0
    %v1416 = vpop.f32.mrb[0].mxu0
    %1417 = vdwg.mxu0
    %1418 = vmatprep.subr.bf16.mxu0 %v919
    %1419 = vmatpush1.bf16.msra.mxu0 %v918
    %1420 = vmatprep.subr.bf16.mxu0 %v927
    %1421 = vmatpush1.bf16.msra.mxu0 %v926
    %1422 = vmatprep.subr.bf16.mxu0 %v935
    %1423 = vmatpush1.bf16.msra.mxu0 %v934
    %1424 = vmatprep.subr.bf16.mxu0 %v943
    %1425 = vmatpush1.bf16.msra.mxu0 %v942
    %1426 = vmatprep.subr.bf16.mxu0 %v951
    %1427 = vmatpush1.bf16.msra.mxu0 %v950
    %1428 = vmatprep.subr.bf16.mxu0 %v959
    %1429 = vmatpush1.bf16.msra.mxu0 %v958
    %1430 = vmatprep.subr.bf16.mxu0 %v967
    %1431 = vmatpush1.bf16.msra.mxu0 %v966
    %1432 = vmatprep.subr.bf16.mxu0 %v975
    %1433 = vmatpush1.bf16.msra.mxu0 %v974
    %1434 = vmatprep.subr.bf16.mxu0 %v983
    %1435 = vmatpush1.bf16.msra.mxu0 %v982
    %1436 = vmatprep.subr.bf16.mxu0 %v991
    %1437 = vmatpush1.bf16.msra.mxu0 %v990
    %1438 = vmatprep.subr.bf16.mxu0 %v999
    %1439 = vmatpush1.bf16.msra.mxu0 %v998
    %1440 = vmatprep.subr.bf16.mxu0 %v1007
    %1441 = vmatpush1.bf16.msra.mxu0 %v1006
    %1442 = vmatprep.subr.bf16.mxu0 %v1015
    %1443 = vmatpush1.bf16.msra.mxu0 %v1014
    %1444 = vmatprep.subr.bf16.mxu0 %v1023
    %1445 = vmatpush1.bf16.msra.mxu0 %v1022
    %1446 = vmatprep.subr.bf16.mxu0 %v1031
    %1447 = vmatpush1.bf16.msra.mxu0 %v1030
    %1448 = vmatprep.subr.bf16.mxu0 %v1039
    %1449 = vmatpush1.bf16.msra.mxu0 %v1038
    %1450 = vmatprep.mubr.bf16.mxu0 %v1175
    %1451 = vmatmul.mubr.bf16.gmra.mrb[0].mxu0 %v1174
    %v1452 = vpop.f32.mrb[0].mxu0
    %v1453 = vadd.f32 %v1241, %v1452
    %v1454 = vpop.f32.mrb[0].mxu0
    %v1455 = vadd.f32 %v1245, %v1454
    %v1456 = vpop.f32.mrb[0].mxu0
    %v1457 = vpop.f32.mrb[0].mxu0
    %1458 = vdwg.mxu0
    %1459 = vmatprep.subr.bf16.mxu0 %v1047
    %1460 = vmatpush1.bf16.msra.mxu0 %v1046
    %1461 = vmatprep.subr.bf16.mxu0 %v1055
    %1462 = vmatpush1.bf16.msra.mxu0 %v1054
    %1463 = vmatprep.subr.bf16.mxu0 %v1063
    %1464 = vmatpush1.bf16.msra.mxu0 %v1062
    %1465 = vmatprep.subr.bf16.mxu0 %v1071
    %1466 = vmatpush1.bf16.msra.mxu0 %v1070
    %1467 = vmatprep.subr.bf16.mxu0 %v1079
    %1468 = vmatpush1.bf16.msra.mxu0 %v1078
    %1469 = vmatprep.subr.bf16.mxu0 %v1087
    %1470 = vmatpush1.bf16.msra.mxu0 %v1086
    %1471 = vmatprep.subr.bf16.mxu0 %v1095
    %1472 = vmatpush1.bf16.msra.mxu0 %v1094
    %1473 = vmatprep.subr.bf16.mxu0 %v1103
    %1474 = vmatpush1.bf16.msra.mxu0 %v1102
    %1475 = vmatprep.subr.bf16.mxu0 %v1111
    %1476 = vmatpush1.bf16.msra.mxu0 %v1110
    %1477 = vmatprep.subr.bf16.mxu0 %v1119
    %1478 = vmatpush1.bf16.msra.mxu0 %v1118
    %1479 = vmatprep.subr.bf16.mxu0 %v1127
    %1480 = vmatpush1.bf16.msra.mxu0 %v1126
    %1481 = vmatprep.subr.bf16.mxu0 %v1135
    %1482 = vmatpush1.bf16.msra.mxu0 %v1134
    %1483 = vmatprep.subr.bf16.mxu0 %v1143
    %1484 = vmatpush1.bf16.msra.mxu0 %v1142
    %1485 = vmatprep.subr.bf16.mxu0 %v1151
    %1486 = vmatpush1.bf16.msra.mxu0 %v1150
    %1487 = vmatprep.subr.bf16.mxu0 %v1159
    %1488 = vmatpush1.bf16.msra.mxu0 %v1158
    %1489 = vmatprep.subr.bf16.mxu0 %v1167
    %1490 = vmatpush1.bf16.msra.mxu0 %v1166
    %1491 = vmatprep.mubr.bf16.mxu0 %v1177
    %1492 = vmatmul.mubr.bf16.gmra.mrb[0].mxu0 %v1176
    %v1493 = vpop.f32.mrb[0].mxu0
    %v1494 = vadd.f32 %v1453, %v1493
    %v1495 = vpop.f32.mrb[0].mxu0
    %v1496 = vadd.f32 %v1455, %v1495
    %v1497 = vpop.f32.mrb[0].mxu0
    %v1498 = vpop.f32.mrb[0].mxu0
    %1499 = vdwg.mxu0
    %1500 = vmatprep.subr.bf16.mxu0 %v921
    %1501 = vmatpush1.bf16.msra.mxu0 %v920
    %1502 = vmatprep.subr.bf16.mxu0 %v929
    %1503 = vmatpush1.bf16.msra.mxu0 %v928
    %1504 = vmatprep.subr.bf16.mxu0 %v937
    %1505 = vmatpush1.bf16.msra.mxu0 %v936
    %1506 = vmatprep.subr.bf16.mxu0 %v945
    %1507 = vmatpush1.bf16.msra.mxu0 %v944
    %1508 = vmatprep.subr.bf16.mxu0 %v953
    %1509 = vmatpush1.bf16.msra.mxu0 %v952
    %1510 = vmatprep.subr.bf16.mxu0 %v961
    %1511 = vmatpush1.bf16.msra.mxu0 %v960
    %1512 = vmatprep.subr.bf16.mxu0 %v969
    %1513 = vmatpush1.bf16.msra.mxu0 %v968
    %1514 = vmatprep.subr.bf16.mxu0 %v977
    %1515 = vmatpush1.bf16.msra.mxu0 %v976
    %1516 = vmatprep.subr.bf16.mxu0 %v985
    %1517 = vmatpush1.bf16.msra.mxu0 %v984
    %1518 = vmatprep.subr.bf16.mxu0 %v993
    %1519 = vmatpush1.bf16.msra.mxu0 %v992
    %1520 = vmatprep.subr.bf16.mxu0 %v1001
    %1521 = vmatpush1.bf16.msra.mxu0 %v1000
    %1522 = vmatprep.subr.bf16.mxu0 %v1009
    %1523 = vmatpush1.bf16.msra.mxu0 %v1008
    %1524 = vmatprep.subr.bf16.mxu0 %v1017
    %1525 = vmatpush1.bf16.msra.mxu0 %v1016
    %1526 = vmatprep.subr.bf16.mxu0 %v1025
    %1527 = vmatpush1.bf16.msra.mxu0 %v1024
    %1528 = vmatprep.subr.bf16.mxu0 %v1033
    %1529 = vmatpush1.bf16.msra.mxu0 %v1032
    %1530 = vmatprep.subr.bf16.mxu0 %v1041
    %1531 = vmatpush1.bf16.msra.mxu0 %v1040
    %1532 = vmatprep.mubr.bf16.mxu0 %v1175
    %1533 = vmatmul.mubr.bf16.gmra.mrb[0].mxu0 %v1174
    %v1534 = vpop.f32.mrb[0].mxu0
    %v1535 = vadd.f32 %v1249, %v1534
    %v1536 = vpop.f32.mrb[0].mxu0
    %v1537 = vadd.f32 %v1253, %v1536
    %v1538 = vpop.f32.mrb[0].mxu0
    %v1539 = vpop.f32.mrb[0].mxu0
    %1540 = vdwg.mxu0
    %1541 = vmatprep.subr.bf16.mxu0 %v1049
    %1542 = vmatpush1.bf16.msra.mxu0 %v1048
    %1543 = vmatprep.subr.bf16.mxu0 %v1057
    %1544 = vmatpush1.bf16.msra.mxu0 %v1056
    %1545 = vmatprep.subr.bf16.mxu0 %v1065
    %1546 = vmatpush1.bf16.msra.mxu0 %v1064
    %1547 = vmatprep.subr.bf16.mxu0 %v1073
    %1548 = vmatpush1.bf16.msra.mxu0 %v1072
    %1549 = vmatprep.subr.bf16.mxu0 %v1081
    %1550 = vmatpush1.bf16.msra.mxu0 %v1080
    %1551 = vmatprep.subr.bf16.mxu0 %v1089
    %1552 = vmatpush1.bf16.msra.mxu0 %v1088
    %1553 = vmatprep.subr.bf16.mxu0 %v1097
    %1554 = vmatpush1.bf16.msra.mxu0 %v1096
    %1555 = vmatprep.subr.bf16.mxu0 %v1105
    %1556 = vmatpush1.bf16.msra.mxu0 %v1104
    %1557 = vmatprep.subr.bf16.mxu0 %v1113
    %1558 = vmatpush1.bf16.msra.mxu0 %v1112
    %1559 = vmatprep.subr.bf16.mxu0 %v1121
    %1560 = vmatpush1.bf16.msra.mxu0 %v1120
    %1561 = vmatprep.subr.bf16.mxu0 %v1129
    %1562 = vmatpush1.bf16.msra.mxu0 %v1128
    %1563 = vmatprep.subr.bf16.mxu0 %v1137
    %1564 = vmatpush1.bf16.msra.mxu0 %v1136
    %1565 = vmatprep.subr.bf16.mxu0 %v1145
    %1566 = vmatpush1.bf16.msra.mxu0 %v1144
    %1567 = vmatprep.subr.bf16.mxu0 %v1153
    %1568 = vmatpush1.bf16.msra.mxu0 %v1152
    %1569 = vmatprep.subr.bf16.mxu0 %v1161
    %1570 = vmatpush1.bf16.msra.mxu0 %v1160
    %1571 = vmatprep.subr.bf16.mxu0 %v1169
    %1572 = vmatpush1.bf16.msra.mxu0 %v1168
    %1573 = vmatprep.mubr.bf16.mxu0 %v1177
    %1574 = vmatmul.mubr.bf16.gmra.mrb[0].mxu0 %v1176
    %v1575 = vpop.f32.mrb[0].mxu0
    %v1576 = vadd.f32 %v1535, %v1575
    %v1577 = vpop.f32.mrb[0].mxu0
    %v1578 = vadd.f32 %v1537, %v1577
    %v1579 = vpop.f32.mrb[0].mxu0
    %v1580 = vpop.f32.mrb[0].mxu0
    %1581 = vdwg.mxu0
    %v1582 = vrot.slane %v1330, 4
    %v1583 = vadd.f32 %v1330, %v1582
    %v1584 = vrot.slane %v1583, 2
    %v1585 = vadd.f32 %v1583, %v1584
    %v1586 = vrot.slane %v1585, 1
    %v1587 = vadd.f32 %v1585, %v1586
    %v1588 = vrot.slane %v1332, 4
    %v1589 = vadd.f32 %v1332, %v1588
    %v1590 = vrot.slane %v1589, 2
    %v1591 = vadd.f32 %v1589, %v1590
    %v1592 = vrot.slane %v1591, 1
    %v1593 = vadd.f32 %v1591, %v1592
    %v1594 = vrot.slane %v1412, 4
    %v1595 = vadd.f32 %v1412, %v1594
    %v1596 = vrot.slane %v1595, 2
    %v1597 = vadd.f32 %v1595, %v1596
    %v1598 = vrot.slane %v1597, 1
    %v1599 = vadd.f32 %v1597, %v1598
    %v1600 = vrot.slane %v1414, 4
    %v1601 = vadd.f32 %v1414, %v1600
    %v1602 = vrot.slane %v1601, 2
    %v1603 = vadd.f32 %v1601, %v1602
    %v1604 = vrot.slane %v1603, 1
    %v1605 = vadd.f32 %v1603, %v1604
    %v1606 = vrot.slane %v1494, 4
    %v1607 = vadd.f32 %v1494, %v1606
    %v1608 = vrot.slane %v1607, 2
    %v1609 = vadd.f32 %v1607, %v1608
    %v1610 = vrot.slane %v1609, 1
    %v1611 = vadd.f32 %v1609, %v1610
    %v1612 = vrot.slane %v1496, 4
    %v1613 = vadd.f32 %v1496, %v1612
    %v1614 = vrot.slane %v1613, 2
    %v1615 = vadd.f32 %v1613, %v1614
    %v1616 = vrot.slane %v1615, 1
    %v1617 = vadd.f32 %v1615, %v1616
    %v1618 = vrot.slane %v1576, 4
    %v1619 = vadd.f32 %v1576, %v1618
    %v1620 = vrot.slane %v1619, 2
    %v1621 = vadd.f32 %v1619, %v1620
    %v1622 = vrot.slane %v1621, 1
    %v1623 = vadd.f32 %v1621, %v1622
    %v1624 = vrot.slane %v1578, 4
    %v1625 = vadd.f32 %v1578, %v1624
    %v1626 = vrot.slane %v1625, 2
    %v1627 = vadd.f32 %v1625, %v1626
    %v1628 = vrot.slane %v1627, 1
    %v1629 = vadd.f32 %v1627, %v1628
    %v1630 = vmul.f32 %v1587, %v441
    %v1631 = vmul.f32 %v1593, %v441
    %v1632 = vmul.f32 %v1599, %v441
    %v1633 = vmul.f32 %v1605, %v441
    %v1634 = vmul.f32 %v1611, %v441
    %v1635 = vmul.f32 %v1617, %v441
    %v1636 = vmul.f32 %v1623, %v441
    %v1637 = vmul.f32 %v1629, %v441
    %v1638 = vsub.f32 %v1330, %v1630
    %v1639 = vsub.f32 %v1332, %v1631
    %v1640 = vsub.f32 %v1412, %v1632
    %v1641 = vsub.f32 %v1414, %v1633
    %v1642 = vsub.f32 %v1494, %v1634
    %v1643 = vsub.f32 %v1496, %v1635
    %v1644 = vsub.f32 %v1576, %v1636
    %v1645 = vsub.f32 %v1578, %v1637
    %v1646 = vmul.f32 %v1638, %v1638
    %v1647 = vmul.f32 %v1639, %v1639
    %v1648 = vmul.f32 %v1640, %v1640
    %v1649 = vmul.f32 %v1641, %v1641
    %v1650 = vmul.f32 %v1642, %v1642
    %v1651 = vmul.f32 %v1643, %v1643
    %v1652 = vmul.f32 %v1644, %v1644
    %v1653 = vmul.f32 %v1645, %v1645
    %v1654 = vrot.slane %v1646, 4
    %v1655 = vadd.f32 %v1646, %v1654
    %v1656 = vrot.slane %v1655, 2
    %v1657 = vadd.f32 %v1655, %v1656
    %v1658 = vrot.slane %v1657, 1
    %v1659 = vadd.f32 %v1657, %v1658
    %v1660 = vrot.slane %v1647, 4
    %v1661 = vadd.f32 %v1647, %v1660
    %v1662 = vrot.slane %v1661, 2
    %v1663 = vadd.f32 %v1661, %v1662
    %v1664 = vrot.slane %v1663, 1
    %v1665 = vadd.f32 %v1663, %v1664
    %v1666 = vrot.slane %v1648, 4
    %v1667 = vadd.f32 %v1648, %v1666
    %v1668 = vrot.slane %v1667, 2
    %v1669 = vadd.f32 %v1667, %v1668
    %v1670 = vrot.slane %v1669, 1
    %v1671 = vadd.f32 %v1669, %v1670
    %v1672 = vrot.slane %v1649, 4
    %v1673 = vadd.f32 %v1649, %v1672
    %v1674 = vrot.slane %v1673, 2
    %v1675 = vadd.f32 %v1673, %v1674
    %v1676 = vrot.slane %v1675, 1
    %v1677 = vadd.f32 %v1675, %v1676
    %v1678 = vrot.slane %v1650, 4
    %v1679 = vadd.f32 %v1650, %v1678
    %v1680 = vrot.slane %v1679, 2
    %v1681 = vadd.f32 %v1679, %v1680
    %v1682 = vrot.slane %v1681, 1
    %v1683 = vadd.f32 %v1681, %v1682
    %v1684 = vrot.slane %v1651, 4
    %v1685 = vadd.f32 %v1651, %v1684
    %v1686 = vrot.slane %v1685, 2
    %v1687 = vadd.f32 %v1685, %v1686
    %v1688 = vrot.slane %v1687, 1
    %v1689 = vadd.f32 %v1687, %v1688
    %v1690 = vrot.slane %v1652, 4
    %v1691 = vadd.f32 %v1652, %v1690
    %v1692 = vrot.slane %v1691, 2
    %v1693 = vadd.f32 %v1691, %v1692
    %v1694 = vrot.slane %v1693, 1
    %v1695 = vadd.f32 %v1693, %v1694
    %v1696 = vrot.slane %v1653, 4
    %v1697 = vadd.f32 %v1653, %v1696
    %v1698 = vrot.slane %v1697, 2
    %v1699 = vadd.f32 %v1697, %v1698
    %v1700 = vrot.slane %v1699, 1
    %v1701 = vadd.f32 %v1699, %v1700
    %v1702 = vmul.f32 %v1659, %v441
    %v1703 = vmul.f32 %v1665, %v441
    %v1704 = vmul.f32 %v1671, %v441
    %v1705 = vmul.f32 %v1677, %v441
    %v1706 = vmul.f32 %v1683, %v441
    %v1707 = vmul.f32 %v1689, %v441
    %v1708 = vmul.f32 %v1695, %v441
    %v1709 = vmul.f32 %v1701, %v441
    %v1710 = vadd.f32 %v1702, 0.8
    %v1711 = vadd.f32 %v1703, 0.8
    %v1712 = vadd.f32 %v1704, 0.8
    %v1713 = vadd.f32 %v1705, 0.8
    %v1714 = vadd.f32 %v1706, 0.8
    %v1715 = vadd.f32 %v1707, 0.8
    %v1716 = vadd.f32 %v1708, 0.8
    %v1717 = vadd.f32 %v1709, 0.8
    %v1718 = vrsqrt.pop %v1710
    %v1719 = vrsqrt.pop %v1711
    %v1720 = vrsqrt.pop %v1712
    %v1721 = vrsqrt.pop %v1713
    %v1722 = vrsqrt.pop %v1714
    %v1723 = vrsqrt.pop %v1715
    %v1724 = vrsqrt.pop %v1716
    %v1725 = vrsqrt.pop %v1717
    %v1734 = vcombine.low %v1718, %v1719
    %v1735 = vcombine.low %v1720, %v1721
    %v1736 = vcombine.low %v1722, %v1723
    %v1737 = vcombine.low %v1724, %v1725
    %v1738 = vrot.slane %v1734, 7
    %v1739 = vrot.slane %v1735, 7
    %v1740 = vrot.slane %v1736, 7
    %v1741 = vrot.slane %v1737, 7
    %v1746 = vmul.f32 %v1170, %v1738
    %v1747 = vmul.f32 %v1171, %v1739
    %v1748 = vmul.f32 %v1172, %v1740
    %v1749 = vmul.f32 %v1173, %v1741
    %v1754 = vlaneseq
    %v1755 = vshrl.u32 %v1754, 7
    %v1756 = vsub.s32 1, %v1755
    %v1757 = vrot.slane %v1746, %v1756
    %v1758 = vlaneseq
    %v1759 = vshrl.u32 %v1758, 7
    %v1760 = vsub.s32 5, %v1759
    %v1761 = vrot.slane %v1746, %v1760
    %v1762 = vlaneseq
    %v1763 = vshrl.u32 %v1762, 7
    %v1764 = vsub.s32 1, %v1763
    %v1765 = vrot.slane %v1747, %v1764
    %v1766 = vlaneseq
    %v1767 = vshrl.u32 %v1766, 7
    %v1768 = vsub.s32 5, %v1767
    %v1769 = vrot.slane %v1747, %v1768
    %v1770 = vlaneseq
    %v1771 = vshrl.u32 %v1770, 7
    %v1772 = vsub.s32 1, %v1771
    %v1773 = vrot.slane %v1748, %v1772
    %v1774 = vlaneseq
    %v1775 = vshrl.u32 %v1774, 7
    %v1776 = vsub.s32 5, %v1775
    %v1777 = vrot.slane %v1748, %v1776
    %v1778 = vlaneseq
    %v1779 = vshrl.u32 %v1778, 7
    %v1780 = vsub.s32 1, %v1779
    %v1781 = vrot.slane %v1749, %v1780
    %v1782 = vlaneseq
    %v1783 = vshrl.u32 %v1782, 7
    %v1784 = vsub.s32 5, %v1783
    %v1785 = vrot.slane %v1749, %v1784
    %v1794 = vmul.f32 %v1630, %v1757
    %v1795 = vmul.f32 %v1631, %v1761
    %v1796 = vmul.f32 %v1632, %v1765
    %v1797 = vmul.f32 %v1633, %v1769
    %v1798 = vmul.f32 %v1634, %v1773
    %v1799 = vmul.f32 %v1635, %v1777
    %v1800 = vmul.f32 %v1636, %v1781
    %v1801 = vmul.f32 %v1637, %v1785
    %v1810 = vcombine.low %v1794, %v1795
    %v1811 = vcombine.low %v1796, %v1797
    %v1812 = vcombine.low %v1798, %v1799
    %v1813 = vcombine.low %v1800, %v1801
    %v1814 = vrot.slane %v1810, 6
    %v1815 = vrot.slane %v1811, 6
    %v1816 = vrot.slane %v1812, 6
    %v1817 = vrot.slane %v1813, 6
    %v1822 = vsub.f32 %v1170, %v1814
    %v1823 = vsub.f32 %v1171, %v1815
    %v1824 = vsub.f32 %v1172, %v1816
    %v1825 = vsub.f32 %v1173, %v1817
    %v1826 = vlaneseq
    %v1827 = vshrl.u32 %v1826, 7
    %v1828 = vsub.s32 1, %v1827
    %v1829 = vrot.slane %v1757, %v1828
    %v1830 = vlaneseq
    %v1831 = vshrl.u32 %v1830, 7
    %v1832 = vsub.s32 1, %v1831
    %v1833 = vrot.slane %v1761, %v1832
    %v1834 = vlaneseq
    %v1835 = vshrl.u32 %v1834, 7
    %v1836 = vsub.s32 1, %v1835
    %v1837 = vrot.slane %v1765, %v1836
    %v1838 = vlaneseq
    %v1839 = vshrl.u32 %v1838, 7
    %v1840 = vsub.s32 1, %v1839
    %v1841 = vrot.slane %v1769, %v1840
    %v1842 = vlaneseq
    %v1843 = vshrl.u32 %v1842, 7
    %v1844 = vsub.s32 1, %v1843
    %v1845 = vrot.slane %v1773, %v1844
    %v1846 = vlaneseq
    %v1847 = vshrl.u32 %v1846, 7
    %v1848 = vsub.s32 1, %v1847
    %v1849 = vrot.slane %v1777, %v1848
    %v1850 = vlaneseq
    %v1851 = vshrl.u32 %v1850, 7
    %v1852 = vsub.s32 1, %v1851
    %v1853 = vrot.slane %v1781, %v1852
    %v1854 = vlaneseq
    %v1855 = vshrl.u32 %v1854, 7
    %v1856 = vsub.s32 1, %v1855
    %v1857 = vrot.slane %v1785, %v1856
    %v1858 = vmul.f32 %v1330, %v1829
    %v1859 = vmul.f32 %v1332, %v1833
    %v1860 = vmul.f32 %v1412, %v1837
    %v1861 = vmul.f32 %v1414, %v1841
    %v1862 = vmul.f32 %v1494, %v1845
    %v1863 = vmul.f32 %v1496, %v1849
    %v1864 = vmul.f32 %v1576, %v1853
    %v1865 = vmul.f32 %v1578, %v1857
    %v1870 = vlaneseq
    %v1871 = vshrl.u32 %v1870, 7
    %v1872 = vsub.s32 2, %v1871
    %v1873 = vrot.slane %v1822, %v1872
    %v1874 = vlaneseq
    %v1875 = vshrl.u32 %v1874, 7
    %v1876 = vsub.s32 6, %v1875
    %v1877 = vrot.slane %v1822, %v1876
    %v1878 = vlaneseq
    %v1879 = vshrl.u32 %v1878, 7
    %v1880 = vsub.s32 2, %v1879
    %v1881 = vrot.slane %v1823, %v1880
    %v1882 = vlaneseq
    %v1883 = vshrl.u32 %v1882, 7
    %v1884 = vsub.s32 6, %v1883
    %v1885 = vrot.slane %v1823, %v1884
    %v1886 = vlaneseq
    %v1887 = vshrl.u32 %v1886, 7
    %v1888 = vsub.s32 2, %v1887
    %v1889 = vrot.slane %v1824, %v1888
    %v1890 = vlaneseq
    %v1891 = vshrl.u32 %v1890, 7
    %v1892 = vsub.s32 6, %v1891
    %v1893 = vrot.slane %v1824, %v1892
    %v1894 = vlaneseq
    %v1895 = vshrl.u32 %v1894, 7
    %v1896 = vsub.s32 2, %v1895
    %v1897 = vrot.slane %v1825, %v1896
    %v1898 = vlaneseq
    %v1899 = vshrl.u32 %v1898, 7
    %v1900 = vsub.s32 6, %v1899
    %v1901 = vrot.slane %v1825, %v1900
    %v1910 = vlaneseq
    %v1911 = vshrl.u32 %v1910, 7
    %v1912 = vsub.s32 2, %v1911
    %v1913 = vrot.slane %v1873, %v1912
    %v1914 = vlaneseq
    %v1915 = vshrl.u32 %v1914, 7
    %v1916 = vsub.s32 2, %v1915
    %v1917 = vrot.slane %v1877, %v1916
    %v1918 = vlaneseq
    %v1919 = vshrl.u32 %v1918, 7
    %v1920 = vsub.s32 2, %v1919
    %v1921 = vrot.slane %v1881, %v1920
    %v1922 = vlaneseq
    %v1923 = vshrl.u32 %v1922, 7
    %v1924 = vsub.s32 2, %v1923
    %v1925 = vrot.slane %v1885, %v1924
    %v1926 = vlaneseq
    %v1927 = vshrl.u32 %v1926, 7
    %v1928 = vsub.s32 2, %v1927
    %v1929 = vrot.slane %v1889, %v1928
    %v1930 = vlaneseq
    %v1931 = vshrl.u32 %v1930, 7
    %v1932 = vsub.s32 2, %v1931
    %v1933 = vrot.slane %v1893, %v1932
    %v1934 = vlaneseq
    %v1935 = vshrl.u32 %v1934, 7
    %v1936 = vsub.s32 2, %v1935
    %v1937 = vrot.slane %v1897, %v1936
    %v1938 = vlaneseq
    %v1939 = vshrl.u32 %v1938, 7
    %v1940 = vsub.s32 2, %v1939
    %v1941 = vrot.slane %v1901, %v1940
    %v1942 = vadd.f32 %v1858, %v1913
    %v1943 = vadd.f32 %v1859, %v1917
    %v1944 = vadd.f32 %v1860, %v1921
    %v1945 = vadd.f32 %v1861, %v1925
    %v1946 = vadd.f32 %v1862, %v1929
    %v1947 = vadd.f32 %v1863, %v1933
    %v1948 = vadd.f32 %v1864, %v1937
    %v1949 = vadd.f32 %v1865, %v1941
    %v1950 = vmul.f32 %v1942, 0.2
    %v1951 = vmul.f32 %v1943, 0.2
    %v1952 = vmul.f32 %v1944, 0.2
    %v1953 = vmul.f32 %v1945, 0.2
    %v1954 = vmul.f32 %v1946, 0.2
    %v1955 = vmul.f32 %v1947, 0.2
    %v1956 = vmul.f32 %v1948, 0.2
    %v1957 = vmul.f32 %v1949, 0.2
    %v1958 = vmax.f32 %v1942, %v1950
    %v1959 = vmax.f32 %v1943, %v1951
    %v1960 = vmax.f32 %v1944, %v1952
    %v1961 = vmax.f32 %v1945, %v1953
    %v1962 = vmax.f32 %v1946, %v1954
    %v1963 = vmax.f32 %v1947, %v1955
    %v1964 = vmax.f32 %v1948, %v1956
    %v1965 = vmax.f32 %v1949, %v1957
    %v1966 = vld [vmem:[#allocation13] sm:$0xff]
    %v1968 = vlaneseq
    %v1969 = vshrl.u32 %v1968, 7
    %v1970 = vsub.s32 0, %v1969
    %v1971 = vrot.slane %v1966, %v1970
    %v1972 = vlaneseq
    %v1973 = vshrl.u32 %v1972, 7
    %v1974 = vsub.s32 1, %v1973
    %v1975 = vrot.slane %v1966, %v1974
    %v1976 = vlaneseq
    %v1977 = vshrl.u32 %v1976, 7
    %v1978 = vsub.s32 2, %v1977
    %v1979 = vrot.slane %v1966, %v1978
    %v1980 = vlaneseq
    %v1981 = vshrl.u32 %v1980, 7
    %v1982 = vsub.s32 3, %v1981
    %v1983 = vrot.slane %v1966, %v1982
    %v1984 = vlaneseq
    %v1985 = vshrl.u32 %v1984, 7
    %v1986 = vsub.s32 4, %v1985
    %v1987 = vrot.slane %v1966, %v1986
    %v1988 = vlaneseq
    %v1989 = vshrl.u32 %v1988, 7
    %v1990 = vsub.s32 5, %v1989
    %v1991 = vrot.slane %v1966, %v1990
    %v1992 = vlaneseq
    %v1993 = vshrl.u32 %v1992, 7
    %v1994 = vsub.s32 6, %v1993
    %v1995 = vrot.slane %v1966, %v1994
    %v1996 = vlaneseq
    %v1997 = vshrl.u32 %v1996, 7
    %v1998 = vsub.s32 7, %v1997
    %v1999 = vrot.slane %v1966, %v1998
    %v2008 = vmul.f32 %v1958, %v1971
    %v2009 = vmul.f32 %v1959, %v1975
    %v2010 = vmul.f32 %v1960, %v1979
    %v2011 = vmul.f32 %v1961, %v1983
    %v2012 = vmul.f32 %v1962, %v1987
    %v2013 = vmul.f32 %v1963, %v1991
    %v2014 = vmul.f32 %v1964, %v1995
    %v2015 = vmul.f32 %v1965, %v1999
    %v2016 = vadd.f32 %v2008, %v2009
    %v2017 = vadd.f32 %v2016, %v2010
    %v2018 = vadd.f32 %v2017, %v2011
    %v2019 = vadd.f32 %v2018, %v2012
    %v2020 = vadd.f32 %v2019, %v2013
    %v2021 = vadd.f32 %v2020, %v2014
    %v2022 = vadd.f32 %v2021, %v2015
    %2023 = vadd.xlane.f32.xlu0 %v2022
    %v2024 = vpop.xlane.xlu0 %2023
    %v2025 = vld [vmem:[#allocation5] sm:$0x1]
    %v2027 = vlaneseq
    %v2028 = vshrl.u32 %v2027, 7
    %v2029 = vsub.s32 0, %v2028
    %v2030 = vrot.slane %v2025, %v2029
    %v2032 = vadd.f32 %v2024, %v2030
    %v2033 = vtanh.pop %v2032
    %vm2034 = vcmask 7168
    %2035 = vst.msk [vmem:[%s12] sm:$0xff] %vm2034, %v2033
    // Predicated region
    $region62: #{generator_forward.1} parent=1 // pred_check
      _
    $region63: #{generator_forward.1} parent=1 // pred_check_branch
      %2037 = sbr.rel (0) target = $region65
    $region64: #{generator_forward.1} parent=1 // pred_region
      _
    $region65: #{generator_forward.1} parent=1 // pred_fallthru
      _
    // Predicated region
    $region66: #{generator_forward.1} parent=1 // pred_check
      _
    $region67: #{generator_forward.1} parent=1 // pred_check_branch
      %2039 = sbr.rel (0) target = $region69
    $region68: #{generator_forward.1} parent=1 // pred_region
      _
    $region69: #{generator_forward.1} parent=1 // pred_fallthru
      _
    %2040 = vsyncpa [#allocation7], 1
    %2041 = vsyncpa [#allocation9], 1
    %2042 = vsyncpa [#allocation12], 1
  %2043 = vsyncmov [#allocation4]
  %s2044 = vpop.sfrf %2043
  %p2045 = scmp.eq.s32.totalorder %s2044, 0
  %p2046 = pneg %p2045
  %2048 = shalt.err (%p2046)
  %s2049 = scalar_lea.sflag [#allocation4], 1
  %2050 = vsyncmov %s2049
  %s2051 = vpop.sfrf %2050
  %p2052 = scmp.eq.s32.totalorder %s2051, 0
  %p2053 = pneg %p2052
  %2055 = shalt.err (%p2053)

</llo_original>
